<compile_context>
chip_gen: v7x
topology: tpu7x:2x2x1
jax: 0.10.0
libtpu: 0.0.40
codegen_flags: <defaults>
</compile_context>

<pallas_src>
import functools

import jax
import jax.numpy as jnp
from jax import lax
from jax.experimental import pallas as pl
from jax.experimental.pallas import tpu as pltpu


# Lane-dense output tile written per sequence (only [0, 0] is meaningful).
OUT_SUB = 8
OUT_LANE = 128


# ----------------------------------------------------------------------------
# Fused per-sequence kernel:
#   QKV -> 2-head attention -> head projection -> LN -> FFN -> LN -> CLS head
# ----------------------------------------------------------------------------
def fused_encoder_cls_kernel(
    x_ref,       # (1, T, H)      one sequence of embedded tokens (compute dtype)
    wq_ref,      # (nh, H, Dk)    query weights, softmax scale folded in
    bq_ref,      # (nh, 1, Dk)    query biases,  softmax scale folded in (f32)
    wk_ref,      # (nh, H, Dk)
    bk_ref,      # (nh, 1, Dk)
    wv_ref,      # (nh, H, Dv)
    bv_ref,      # (nh, 1, Dv)
    wp_ref,      # (nh, Dv, H)    head projection, split per head
    bp_ref,      # (1, H)
    gamma_ref,   # (1, H)
    beta_ref,    # (1, H)
    w1_ref,      # (H, FF)
    b1_ref,      # (1, FF)
    w2_ref,      # (FF, H)
    b2_ref,      # (1, H)
    wfl_ref,     # (H, 1)
    bfl_ref,     # (1, 1)
    out_ref,     # (1, OUT_SUB, OUT_LANE)  sigmoid score broadcast (lane-dense store)
):
    cd = wq_ref.dtype                       # bf16 on v6e/v7x, f32 for exact mode
    num_heads = wq_ref.shape[0]

    x = x_ref[0]                            # (T, H) compute dtype
    x32 = x.astype(jnp.float32)
    T, H = x.shape

    def mm(a, b):
        # MXU matmul in compute dtype, f32 accumulation.
        return jnp.dot(a.astype(cd), b.astype(cd),
                       preferred_element_type=jnp.float32)

    # ---- multi-head self-attention; projection accumulated per head --------
    proj = jnp.zeros((T, H), jnp.float32)
    for h in range(num_heads):              # heads unrolled (static)
        q = mm(x, wq_ref[h]) + bq_ref[h]    # (T, Dk)  scale already folded in
        k = mm(x, wk_ref[h]) + bk_ref[h]    # (T, Dk)
        v = mm(x, wv_ref[h]) + bv_ref[h]    # (T, Dv)

        # Scores: contract last dims of q and k directly (no k.T relayout).
        s = lax.dot_general(q.astype(cd), k.astype(cd),
                            (((1,), (1,)), ((), ())),
                            preferred_element_type=jnp.float32)   # (T, T)

        # Softmax in f32; normalize AFTER the PV matmul (O(T*Dv) divide).
        m = jnp.max(s, axis=-1, keepdims=True)
        e = jnp.exp(s - m)                                         # (T, T)
        denom = jnp.sum(e, axis=-1, keepdims=True)                 # (T, 1)
        pv = mm(e, v)                                              # (T, Dv)
        a = pv / denom        # exact; pl.reciprocal(denom, approx=True) = EUP knob

        proj = proj + mm(a, wp_ref[h])                             # accumulate heads
    proj = proj + bp_ref[...]

    gamma = gamma_ref[...]
    beta = beta_ref[...]

    def layernorm(y):                       # f32 mean/var
        mu = jnp.mean(y, axis=-1, keepdims=True)
        d = y - mu
        var = jnp.mean(d * d, axis=-1, keepdims=True)
        return d * lax.rsqrt(var + 1e-5) * gamma + beta

    h1 = layernorm(x32 + proj)

    ff_hidden = jnp.maximum(mm(h1, w1_ref[...]) + b1_ref[...], 0.0)
    ff = mm(ff_hidden, w2_ref[...]) + b2_ref[...]
    h2 = layernorm(h1 + ff)

    # ---- classification head on the CLS row only ---------------------------
    cls = h2[0:1, :]                                               # (1, H)
    logit = mm(cls, wfl_ref[...]) + bfl_ref[...]                   # (1, 1)
    score = jax.nn.sigmoid(logit)
    out_ref[...] = jnp.broadcast_to(score, out_ref.shape)          # lane-dense tile


# ----------------------------------------------------------------------------
# Forward wrapper
# ----------------------------------------------------------------------------
@jax.jit
def classification_transformer(tokens, fused):
    N, T = tokens.shape
    H = fused["emb"].shape[1]
    cd = fused["wq"].dtype

    # Embedding + positional lookup (data-dependent gather -> JAX glue).
    x = (fused["emb"][tokens] + fused["pos"][None, :T, :]).astype(cd)   # (N, T, H)

    def resident(arr):
        # Whole-array block with a constant index_map: fetched once, stays in VMEM.
        nd = arr.ndim
        return pl.BlockSpec(arr.shape, lambda n, nd=nd: (0,) * nd)

    weights = (fused["wq"], fused["bq"], fused["wk"], fused["bk"],
               fused["wv"], fused["bv"], fused["wp"], fused["bp"],
               fused["gamma"], fused["beta"], fused["w1"], fused["b1"],
               fused["w2"], fused["b2"], fused["wfl"], fused["bfl"])

    in_specs = [pl.BlockSpec((1, T, H), lambda n: (n, 0, 0))]            # x: one seq/step
    in_specs += [resident(w) for w in weights]

    out_all = pl.pallas_call(
        fused_encoder_cls_kernel,
        out_shape=jax.ShapeDtypeStruct((N, OUT_SUB, OUT_LANE), jnp.float32),
        grid=(N,),
        in_specs=in_specs,
        out_specs=pl.BlockSpec((1, OUT_SUB, OUT_LANE), lambda n: (n, 0, 0)),
        compiler_params=pltpu.CompilerParams(
            dimension_semantics=("parallel",),          # v7x: shard batch over 2 TCs
            vmem_limit_bytes=32 * 1024 * 1024,          # explicit, v5e/v6e/v7x safe
        ),
    )(x, *weights)

    return out_all[:, 0, 0:1]                                            # (N, 1)


# ----------------------------------------------------------------------------
# One-time parameter prep (hoisted out of the forward path):
#   * stack per-head Q/K/V weights on a leading head axis (no lane-axis concat)
#   * fold the 1/sqrt(dim_k) softmax scale into the query weights/biases
#   * split the head projection per head
#   * cast matmul operands to the compute dtype (bf16 for v6e/v7x MXU peak)
# ----------------------------------------------------------------------------
def prepare_params(p, compute_dtype=jnp.float32):
    dk = p["wq1"].shape[1]
    dv = p["wv1"].shape[1]
    scale = 1.0 / (dk ** 0.5)

    f = {}
    f["emb"] = p["emb"]
    f["pos"] = p["pos"]

    f["wq"] = jnp.stack([p["wq1"] * scale, p["wq2"] * scale]).astype(compute_dtype)
    f["bq"] = jnp.stack([p["bq1"] * scale, p["bq2"] * scale])            # f32
    f["wk"] = jnp.stack([p["wk1"], p["wk2"]]).astype(compute_dtype)
    f["bk"] = jnp.stack([p["bk1"], p["bk2"]])
    f["wv"] = jnp.stack([p["wv1"], p["wv2"]]).astype(compute_dtype)
    f["bv"] = jnp.stack([p["bv1"], p["bv2"]])
    f["wp"] = jnp.stack([p["wp"][:dv], p["wp"][dv:]]).astype(compute_dtype)
    f["bp"] = p["bp"]

    f["gamma"] = p["gamma"]
    f["beta"] = p["beta"]

    f["w1"] = p["w1f"].astype(compute_dtype)
    f["b1"] = p["b1f"]
    f["w2"] = p["w2f"].astype(compute_dtype)
    f["b2"] = p["b2f"]

    f["wfl"] = p["wfl"].astype(compute_dtype)
    f["bfl"] = p["bfl"]
    return f


# ----------------------------------------------------------------------------
# Deterministic parameter init (shapes mirror the module's __init__, scaled down)
# ----------------------------------------------------------------------------
def init_params(key, vocab_size, max_length, hidden_dim, dim_k, dim_v, dim_ff):
    keys = iter(jax.random.split(key, 32))

    def lin(din, dout):
        bound = 1.0 / (din ** 0.5)
        w = jax.random.uniform(next(keys), (din, dout), jnp.float32, -bound, bound)
        b = jax.random.uniform(next(keys), (1, dout), jnp.float32, -bound, bound)
        return w, b

    p = {}
    p["emb"] = jax.random.normal(next(keys), (vocab_size, hidden_dim), jnp.float32)
    p["pos"] = jax.random.normal(next(keys), (max_length, hidden_dim), jnp.float32)

    p["wq1"], p["bq1"] = lin(hidden_dim, dim_k)
    p["wk1"], p["bk1"] = lin(hidden_dim, dim_k)
    p["wv1"], p["bv1"] = lin(hidden_dim, dim_v)
    p["wq2"], p["bq2"] = lin(hidden_dim, dim_k)
    p["wk2"], p["bk2"] = lin(hidden_dim, dim_k)
    p["wv2"], p["bv2"] = lin(hidden_dim, dim_v)

    p["wp"], p["bp"] = lin(2 * dim_v, hidden_dim)            # attention_head_projection

    p["gamma"] = jnp.ones((1, hidden_dim), jnp.float32)      # norm_mh
    p["beta"] = jnp.zeros((1, hidden_dim), jnp.float32)

    p["w1f"], p["b1f"] = lin(hidden_dim, dim_ff)
    p["w2f"], p["b2f"] = lin(dim_ff, hidden_dim)

    wfl, bfl = lin(hidden_dim, 1)
    p["wfl"] = wfl                                           # (H, 1)
    p["bfl"] = bfl.reshape(1, 1)                             # (1, 1)
    return p


# ----------------------------------------------------------------------------
# Pure-JAX reference (mirrors the PyTorch forward) for the correctness check.
# ----------------------------------------------------------------------------
def reference(tokens, p):
    x = p["emb"][tokens] + p["pos"][None, : tokens.shape[1], :]

    def head(wq, bq, wk, bk, wv, bv):
        q = x @ wq + bq
        k = x @ wk + bk
        v = x @ wv + bv
        s = jnp.einsum("ntd,nsd->nts", q, k) / (k.shape[-1] ** 0.5)
        return jnp.einsum("nts,nsd->ntd", jax.nn.softmax(s, axis=-1), v)

    a1 = head(p["wq1"], p["bq1"], p["wk1"], p["bk1"], p["wv1"], p["bv1"])
    a2 = head(p["wq2"], p["bq2"], p["wk2"], p["bk2"], p["wv2"], p["bv2"])
    proj = jnp.concatenate([a1, a2], axis=-1) @ p["wp"] + p["bp"]

    def ln(y):
        mu = jnp.mean(y, axis=-1, keepdims=True)
        var = jnp.mean((y - mu) ** 2, axis=-1, keepdims=True)
        return (y - mu) / jnp.sqrt(var + 1e-5) * p["gamma"] + p["beta"]

    h = ln(x + proj)
    ff = jnp.maximum(h @ p["w1f"] + p["b1f"], 0.0) @ p["w2f"] + p["b2f"]
    h2 = ln(h + ff)
    cls = h2[:, 0, :]
    return jax.nn.sigmoid(cls @ p["wfl"] + p["bfl"])


if __name__ == "__main__":
    # Small shapes consistent with the module's forward:
    # N=2 sequences of length T=max_length=8, hidden_dim=32, num_heads=2,
    # dim_k=dim_v=dim_q=16, dim_feedforward=64, vocab=50.
    N, T, H = 2, 8, 32
    DK = DV = 16
    FF = 64
    V = 50

    key = jax.random.PRNGKey(0)
    k_tok, k_par = jax.random.split(key)
    tokens = jax.random.randint(k_tok, (N, T), 0, V, dtype=jnp.int32)
    params = init_params(k_par, V, T, H, DK, DV, FF)

    ref = reference(tokens, params)

    # --- exact-numerics mode (f32 matmul operands) ---------------------------
    fused_f32 = prepare_params(params, compute_dtype=jnp.float32)
    out_f32 = jax.block_until_ready(classification_transformer(tokens, fused_f32))
    assert out_f32.shape == (N, 1), out_f32.shape
    assert jnp.allclose(out_f32, ref, rtol=1e-4, atol=1e-4), (out_f32, ref)

    # --- throughput mode (bf16 MXU operands, f32 accumulation / elementwise) -
    fused_bf16 = prepare_params(params, compute_dtype=jnp.bfloat16)
    out_bf16 = jax.block_until_ready(classification_transformer(tokens, fused_bf16))
    assert out_bf16.shape == (N, 1), out_bf16.shape
    assert jnp.allclose(out_bf16, ref, atol=1e-1), (out_bf16, ref)

    print("KERNEL_OK")
</pallas_src>

<mosaic_0001>
module attributes {stable_mosaic.version = 11 : i64} {
  func.func @fused_encoder_cls_kernel(%arg0: i32, %arg1: memref<1x8x32xf32, #tpu.memory_space<vmem>>, %arg2: memref<2x32x16xf32, #tpu.memory_space<vmem>>, %arg3: memref<2x1x16xf32, #tpu.memory_space<vmem>>, %arg4: memref<2x32x16xf32, #tpu.memory_space<vmem>>, %arg5: memref<2x1x16xf32, #tpu.memory_space<vmem>>, %arg6: memref<2x32x16xf32, #tpu.memory_space<vmem>>, %arg7: memref<2x1x16xf32, #tpu.memory_space<vmem>>, %arg8: memref<2x16x32xf32, #tpu.memory_space<vmem>>, %arg9: memref<1x32xf32, #tpu.memory_space<vmem>>, %arg10: memref<1x32xf32, #tpu.memory_space<vmem>>, %arg11: memref<1x32xf32, #tpu.memory_space<vmem>>, %arg12: memref<32x64xf32, #tpu.memory_space<vmem>>, %arg13: memref<1x64xf32, #tpu.memory_space<vmem>>, %arg14: memref<64x32xf32, #tpu.memory_space<vmem>>, %arg15: memref<1x32xf32, #tpu.memory_space<vmem>>, %arg16: memref<32x1xf32, #tpu.memory_space<vmem>>, %arg17: memref<1x1xf32, #tpu.memory_space<vmem>>, %arg18: memref<1x8x128xf32, #tpu.memory_space<vmem>>) attributes {dimension_semantics = [#tpu.dimension_semantics<parallel>], iteration_bounds = array<i64: 2>, scalar_prefetch = 0 : i64, scratch_operands = 0 : i64, tpu.core_type = #tpu.core_type<tc>, window_params = [{transform_indices = @transform_0, window_bounds = array<i64: 1, 8, 32>}, {pipeline_mode = #tpu.pipeline_mode<synchronous>, transform_indices = @transform_1, window_bounds = array<i64: 2, 32, 16>}, {pipeline_mode = #tpu.pipeline_mode<synchronous>, transform_indices = @transform_2, window_bounds = array<i64: 2, 1, 16>}, {pipeline_mode = #tpu.pipeline_mode<synchronous>, transform_indices = @transform_3, window_bounds = array<i64: 2, 32, 16>}, {pipeline_mode = #tpu.pipeline_mode<synchronous>, transform_indices = @transform_4, window_bounds = array<i64: 2, 1, 16>}, {pipeline_mode = #tpu.pipeline_mode<synchronous>, transform_indices = @transform_5, window_bounds = array<i64: 2, 32, 16>}, {pipeline_mode = #tpu.pipeline_mode<synchronous>, transform_indices = @transform_6, window_bounds = array<i64: 2, 1, 16>}, {pipeline_mode = #tpu.pipeline_mode<synchronous>, transform_indices = @transform_7, window_bounds = array<i64: 2, 16, 32>}, {pipeline_mode = #tpu.pipeline_mode<synchronous>, transform_indices = @transform_8, window_bounds = array<i64: 1, 32>}, {pipeline_mode = #tpu.pipeline_mode<synchronous>, transform_indices = @transform_9, window_bounds = array<i64: 1, 32>}, {pipeline_mode = #tpu.pipeline_mode<synchronous>, transform_indices = @transform_10, window_bounds = array<i64: 1, 32>}, {pipeline_mode = #tpu.pipeline_mode<synchronous>, transform_indices = @transform_11, window_bounds = array<i64: 32, 64>}, {pipeline_mode = #tpu.pipeline_mode<synchronous>, transform_indices = @transform_12, window_bounds = array<i64: 1, 64>}, {pipeline_mode = #tpu.pipeline_mode<synchronous>, transform_indices = @transform_13, window_bounds = array<i64: 64, 32>}, {pipeline_mode = #tpu.pipeline_mode<synchronous>, transform_indices = @transform_14, window_bounds = array<i64: 1, 32>}, {pipeline_mode = #tpu.pipeline_mode<synchronous>, transform_indices = @transform_15, window_bounds = array<i64: 32, 1>}, {pipeline_mode = #tpu.pipeline_mode<synchronous>, transform_indices = @transform_16, window_bounds = array<i64: 1, 1>}, {transform_indices = @transform_17, window_bounds = array<i64: 1, 8, 128>}]} {
    %c0 = arith.constant 0 : index
    %c0_0 = arith.constant 0 : index
    %c0_1 = arith.constant 0 : index
    %0 = vector.load %arg1[%c0, %c0_0, %c0_1] : memref<1x8x32xf32, #tpu.memory_space<vmem>>, vector<1x8x32xf32>
    %1 = vector.shape_cast %0 : vector<1x8x32xf32> to vector<8x32xf32>
    %cst = arith.constant 0.000000e+00 : f32
    %2 = vector.broadcast %cst : f32 to vector<8x32xf32>
    %c0_2 = arith.constant 0 : index
    %c0_3 = arith.constant 0 : index
    %c0_4 = arith.constant 0 : index
    %3 = vector.load %arg2[%c0_2, %c0_3, %c0_4] : memref<2x32x16xf32, #tpu.memory_space<vmem>>, vector<1x32x16xf32>
    %4 = vector.shape_cast %3 : vector<1x32x16xf32> to vector<32x16xf32>
    %cst_5 = arith.constant dense<0.000000e+00> : vector<8x16xf32>
    %5 = tpu.matmul %1, %4, %cst_5 {dimension_numbers = #tpu.dot_dimension_numbers<[1], [0], [0], [1], [0, 0, 1, 1], [], []>} : vector<8x32xf32>, vector<32x16xf32>, vector<8x16xf32> -> vector<8x16xf32>
    %c0_6 = arith.constant 0 : index
    %c0_7 = arith.constant 0 : index
    %c0_8 = arith.constant 0 : index
    %6 = vector.load %arg3[%c0_6, %c0_7, %c0_8] : memref<2x1x16xf32, #tpu.memory_space<vmem>>, vector<1x1x16xf32>
    %7 = vector.shape_cast %6 : vector<1x1x16xf32> to vector<1x16xf32>
    %8 = vector.broadcast %7 : vector<1x16xf32> to vector<8x16xf32>
    %9 = arith.addf %5, %8 : vector<8x16xf32>
    %c0_9 = arith.constant 0 : index
    %c0_10 = arith.constant 0 : index
    %c0_11 = arith.constant 0 : index
    %10 = vector.load %arg4[%c0_9, %c0_10, %c0_11] : memref<2x32x16xf32, #tpu.memory_space<vmem>>, vector<1x32x16xf32>
    %11 = vector.shape_cast %10 : vector<1x32x16xf32> to vector<32x16xf32>
    %cst_12 = arith.constant dense<0.000000e+00> : vector<8x16xf32>
    %12 = tpu.matmul %1, %11, %cst_12 {dimension_numbers = #tpu.dot_dimension_numbers<[1], [0], [0], [1], [0, 0, 1, 1], [], []>} : vector<8x32xf32>, vector<32x16xf32>, vector<8x16xf32> -> vector<8x16xf32>
    %c0_13 = arith.constant 0 : index
    %c0_14 = arith.constant 0 : index
    %c0_15 = arith.constant 0 : index
    %13 = vector.load %arg5[%c0_13, %c0_14, %c0_15] : memref<2x1x16xf32, #tpu.memory_space<vmem>>, vector<1x1x16xf32>
    %14 = vector.shape_cast %13 : vector<1x1x16xf32> to vector<1x16xf32>
    %15 = vector.broadcast %14 : vector<1x16xf32> to vector<8x16xf32>
    %16 = arith.addf %12, %15 : vector<8x16xf32>
    %c0_16 = arith.constant 0 : index
    %c0_17 = arith.constant 0 : index
    %c0_18 = arith.constant 0 : index
    %17 = vector.load %arg6[%c0_16, %c0_17, %c0_18] : memref<2x32x16xf32, #tpu.memory_space<vmem>>, vector<1x32x16xf32>
    %18 = vector.shape_cast %17 : vector<1x32x16xf32> to vector<32x16xf32>
    %cst_19 = arith.constant dense<0.000000e+00> : vector<8x16xf32>
    %19 = tpu.matmul %1, %18, %cst_19 {dimension_numbers = #tpu.dot_dimension_numbers<[1], [0], [0], [1], [0, 0, 1, 1], [], []>} : vector<8x32xf32>, vector<32x16xf32>, vector<8x16xf32> -> vector<8x16xf32>
    %c0_20 = arith.constant 0 : index
    %c0_21 = arith.constant 0 : index
    %c0_22 = arith.constant 0 : index
    %20 = vector.load %arg7[%c0_20, %c0_21, %c0_22] : memref<2x1x16xf32, #tpu.memory_space<vmem>>, vector<1x1x16xf32>
    %21 = vector.shape_cast %20 : vector<1x1x16xf32> to vector<1x16xf32>
    %22 = vector.broadcast %21 : vector<1x16xf32> to vector<8x16xf32>
    %23 = arith.addf %19, %22 : vector<8x16xf32>
    %cst_23 = arith.constant dense<0.000000e+00> : vector<8x8xf32>
    %24 = tpu.matmul %9, %16, %cst_23 {dimension_numbers = #tpu.dot_dimension_numbers<[1], [1], [0], [0], [0, 0, 1, 0], [], []>} : vector<8x16xf32>, vector<8x16xf32>, vector<8x8xf32> -> vector<8x8xf32>
    %cst_24 = arith.constant dense<0xFF800000> : vector<8xf32>
    %25 = vector.multi_reduction <maximumf>, %24, %cst_24 [1] : vector<8x8xf32> to vector<8xf32>
    %26 = vector.shape_cast %25 : vector<8xf32> to vector<8x1xf32>
    %27 = vector.broadcast %26 : vector<8x1xf32> to vector<8x8xf32>
    %28 = arith.subf %24, %27 : vector<8x8xf32>
    %29 = math.exp %28 : vector<8x8xf32>
    %cst_25 = arith.constant dense<0.000000e+00> : vector<8xf32>
    %30 = vector.multi_reduction <add>, %29, %cst_25 [1] : vector<8x8xf32> to vector<8xf32>
    %31 = vector.shape_cast %30 : vector<8xf32> to vector<8x1xf32>
    %cst_26 = arith.constant dense<0.000000e+00> : vector<8x16xf32>
    %32 = tpu.matmul %29, %23, %cst_26 {dimension_numbers = #tpu.dot_dimension_numbers<[1], [0], [0], [1], [0, 0, 1, 1], [], []>} : vector<8x8xf32>, vector<8x16xf32>, vector<8x16xf32> -> vector<8x16xf32>
    %33 = vector.broadcast %31 : vector<8x1xf32> to vector<8x16xf32>
    %34 = arith.divf %32, %33 : vector<8x16xf32>
    %c0_27 = arith.constant 0 : index
    %c0_28 = arith.constant 0 : index
    %c0_29 = arith.constant 0 : index
    %35 = vector.load %arg8[%c0_27, %c0_28, %c0_29] : memref<2x16x32xf32, #tpu.memory_space<vmem>>, vector<1x16x32xf32>
    %36 = vector.shape_cast %35 : vector<1x16x32xf32> to vector<16x32xf32>
    %cst_30 = arith.constant dense<0.000000e+00> : vector<8x32xf32>
    %37 = tpu.matmul %34, %36, %cst_30 {dimension_numbers = #tpu.dot_dimension_numbers<[1], [0], [0], [1], [0, 0, 1, 1], [], []>} : vector<8x16xf32>, vector<16x32xf32>, vector<8x32xf32> -> vector<8x32xf32>
    %38 = arith.addf %2, %37 : vector<8x32xf32>
    %c1 = arith.constant 1 : index
    %c0_31 = arith.constant 0 : index
    %c0_32 = arith.constant 0 : index
    %39 = vector.load %arg2[%c1, %c0_31, %c0_32] : memref<2x32x16xf32, #tpu.memory_space<vmem>>, vector<1x32x16xf32>
    %40 = vector.shape_cast %39 : vector<1x32x16xf32> to vector<32x16xf32>
    %cst_33 = arith.constant dense<0.000000e+00> : vector<8x16xf32>
    %41 = tpu.matmul %1, %40, %cst_33 {dimension_numbers = #tpu.dot_dimension_numbers<[1], [0], [0], [1], [0, 0, 1, 1], [], []>} : vector<8x32xf32>, vector<32x16xf32>, vector<8x16xf32> -> vector<8x16xf32>
    %c1_34 = arith.constant 1 : index
    %c0_35 = arith.constant 0 : index
    %c0_36 = arith.constant 0 : index
    %42 = vector.load %arg3[%c1_34, %c0_35, %c0_36] : memref<2x1x16xf32, #tpu.memory_space<vmem>>, vector<1x1x16xf32>
    %43 = vector.shape_cast %42 : vector<1x1x16xf32> to vector<1x16xf32>
    %44 = vector.broadcast %43 : vector<1x16xf32> to vector<8x16xf32>
    %45 = arith.addf %41, %44 : vector<8x16xf32>
    %c1_37 = arith.constant 1 : index
    %c0_38 = arith.constant 0 : index
    %c0_39 = arith.constant 0 : index
    %46 = vector.load %arg4[%c1_37, %c0_38, %c0_39] : memref<2x32x16xf32, #tpu.memory_space<vmem>>, vector<1x32x16xf32>
    %47 = vector.shape_cast %46 : vector<1x32x16xf32> to vector<32x16xf32>
    %cst_40 = arith.constant dense<0.000000e+00> : vector<8x16xf32>
    %48 = tpu.matmul %1, %47, %cst_40 {dimension_numbers = #tpu.dot_dimension_numbers<[1], [0], [0], [1], [0, 0, 1, 1], [], []>} : vector<8x32xf32>, vector<32x16xf32>, vector<8x16xf32> -> vector<8x16xf32>
    %c1_41 = arith.constant 1 : index
    %c0_42 = arith.constant 0 : index
    %c0_43 = arith.constant 0 : index
    %49 = vector.load %arg5[%c1_41, %c0_42, %c0_43] : memref<2x1x16xf32, #tpu.memory_space<vmem>>, vector<1x1x16xf32>
    %50 = vector.shape_cast %49 : vector<1x1x16xf32> to vector<1x16xf32>
    %51 = vector.broadcast %50 : vector<1x16xf32> to vector<8x16xf32>
    %52 = arith.addf %48, %51 : vector<8x16xf32>
    %c1_44 = arith.constant 1 : index
    %c0_45 = arith.constant 0 : index
    %c0_46 = arith.constant 0 : index
    %53 = vector.load %arg6[%c1_44, %c0_45, %c0_46] : memref<2x32x16xf32, #tpu.memory_space<vmem>>, vector<1x32x16xf32>
    %54 = vector.shape_cast %53 : vector<1x32x16xf32> to vector<32x16xf32>
    %cst_47 = arith.constant dense<0.000000e+00> : vector<8x16xf32>
    %55 = tpu.matmul %1, %54, %cst_47 {dimension_numbers = #tpu.dot_dimension_numbers<[1], [0], [0], [1], [0, 0, 1, 1], [], []>} : vector<8x32xf32>, vector<32x16xf32>, vector<8x16xf32> -> vector<8x16xf32>
    %c1_48 = arith.constant 1 : index
    %c0_49 = arith.constant 0 : index
    %c0_50 = arith.constant 0 : index
    %56 = vector.load %arg7[%c1_48, %c0_49, %c0_50] : memref<2x1x16xf32, #tpu.memory_space<vmem>>, vector<1x1x16xf32>
    %57 = vector.shape_cast %56 : vector<1x1x16xf32> to vector<1x16xf32>
    %58 = vector.broadcast %57 : vector<1x16xf32> to vector<8x16xf32>
    %59 = arith.addf %55, %58 : vector<8x16xf32>
    %cst_51 = arith.constant dense<0.000000e+00> : vector<8x8xf32>
    %60 = tpu.matmul %45, %52, %cst_51 {dimension_numbers = #tpu.dot_dimension_numbers<[1], [1], [0], [0], [0, 0, 1, 0], [], []>} : vector<8x16xf32>, vector<8x16xf32>, vector<8x8xf32> -> vector<8x8xf32>
    %cst_52 = arith.constant dense<0xFF800000> : vector<8xf32>
    %61 = vector.multi_reduction <maximumf>, %60, %cst_52 [1] : vector<8x8xf32> to vector<8xf32>
    %62 = vector.shape_cast %61 : vector<8xf32> to vector<8x1xf32>
    %63 = vector.broadcast %62 : vector<8x1xf32> to vector<8x8xf32>
    %64 = arith.subf %60, %63 : vector<8x8xf32>
    %65 = math.exp %64 : vector<8x8xf32>
    %cst_53 = arith.constant dense<0.000000e+00> : vector<8xf32>
    %66 = vector.multi_reduction <add>, %65, %cst_53 [1] : vector<8x8xf32> to vector<8xf32>
    %67 = vector.shape_cast %66 : vector<8xf32> to vector<8x1xf32>
    %cst_54 = arith.constant dense<0.000000e+00> : vector<8x16xf32>
    %68 = tpu.matmul %65, %59, %cst_54 {dimension_numbers = #tpu.dot_dimension_numbers<[1], [0], [0], [1], [0, 0, 1, 1], [], []>} : vector<8x8xf32>, vector<8x16xf32>, vector<8x16xf32> -> vector<8x16xf32>
    %69 = vector.broadcast %67 : vector<8x1xf32> to vector<8x16xf32>
    %70 = arith.divf %68, %69 : vector<8x16xf32>
    %c1_55 = arith.constant 1 : index
    %c0_56 = arith.constant 0 : index
    %c0_57 = arith.constant 0 : index
    %71 = vector.load %arg8[%c1_55, %c0_56, %c0_57] : memref<2x16x32xf32, #tpu.memory_space<vmem>>, vector<1x16x32xf32>
    %72 = vector.shape_cast %71 : vector<1x16x32xf32> to vector<16x32xf32>
    %cst_58 = arith.constant dense<0.000000e+00> : vector<8x32xf32>
    %73 = tpu.matmul %70, %72, %cst_58 {dimension_numbers = #tpu.dot_dimension_numbers<[1], [0], [0], [1], [0, 0, 1, 1], [], []>} : vector<8x16xf32>, vector<16x32xf32>, vector<8x32xf32> -> vector<8x32xf32>
    %74 = arith.addf %38, %73 : vector<8x32xf32>
    %c0_59 = arith.constant 0 : index
    %c0_60 = arith.constant 0 : index
    %75 = vector.load %arg9[%c0_59, %c0_60] : memref<1x32xf32, #tpu.memory_space<vmem>>, vector<1x32xf32>
    %76 = vector.broadcast %75 : vector<1x32xf32> to vector<8x32xf32>
    %77 = arith.addf %74, %76 : vector<8x32xf32>
    %c0_61 = arith.constant 0 : index
    %c0_62 = arith.constant 0 : index
    %78 = vector.load %arg10[%c0_61, %c0_62] : memref<1x32xf32, #tpu.memory_space<vmem>>, vector<1x32xf32>
    %c0_63 = arith.constant 0 : index
    %c0_64 = arith.constant 0 : index
    %79 = vector.load %arg11[%c0_63, %c0_64] : memref<1x32xf32, #tpu.memory_space<vmem>>, vector<1x32xf32>
    %80 = arith.addf %1, %77 : vector<8x32xf32>
    %cst_65 = arith.constant dense<0.000000e+00> : vector<8xf32>
    %81 = vector.multi_reduction <add>, %80, %cst_65 [1] : vector<8x32xf32> to vector<8xf32>
    %82 = vector.shape_cast %81 : vector<8xf32> to vector<8x1xf32>
    %cst_66 = arith.constant 3.200000e+01 : f32
    %83 = vector.broadcast %cst_66 : f32 to vector<8x1xf32>
    %84 = arith.divf %82, %83 : vector<8x1xf32>
    %85 = vector.broadcast %84 : vector<8x1xf32> to vector<8x32xf32>
    %86 = arith.subf %80, %85 : vector<8x32xf32>
    %87 = arith.mulf %86, %86 : vector<8x32xf32>
    %cst_67 = arith.constant dense<0.000000e+00> : vector<8xf32>
    %88 = vector.multi_reduction <add>, %87, %cst_67 [1] : vector<8x32xf32> to vector<8xf32>
    %89 = vector.shape_cast %88 : vector<8xf32> to vector<8x1xf32>
    %cst_68 = arith.constant 3.200000e+01 : f32
    %90 = vector.broadcast %cst_68 : f32 to vector<8x1xf32>
    %91 = arith.divf %89, %90 : vector<8x1xf32>
    %cst_69 = arith.constant 9.99999974E-6 : f32
    %92 = vector.broadcast %cst_69 : f32 to vector<8x1xf32>
    %93 = arith.addf %91, %92 : vector<8x1xf32>
    %94 = math.rsqrt %93 : vector<8x1xf32>
    %95 = vector.broadcast %94 : vector<8x1xf32> to vector<8x32xf32>
    %96 = arith.mulf %86, %95 : vector<8x32xf32>
    %97 = vector.broadcast %78 : vector<1x32xf32> to vector<8x32xf32>
    %98 = arith.mulf %96, %97 : vector<8x32xf32>
    %99 = vector.broadcast %79 : vector<1x32xf32> to vector<8x32xf32>
    %100 = arith.addf %98, %99 : vector<8x32xf32>
    %c0_70 = arith.constant 0 : index
    %c0_71 = arith.constant 0 : index
    %101 = vector.load %arg12[%c0_70, %c0_71] : memref<32x64xf32, #tpu.memory_space<vmem>>, vector<32x64xf32>
    %cst_72 = arith.constant dense<0.000000e+00> : vector<8x64xf32>
    %102 = tpu.matmul %100, %101, %cst_72 {dimension_numbers = #tpu.dot_dimension_numbers<[1], [0], [0], [1], [0, 0, 1, 1], [], []>} : vector<8x32xf32>, vector<32x64xf32>, vector<8x64xf32> -> vector<8x64xf32>
    %c0_73 = arith.constant 0 : index
    %c0_74 = arith.constant 0 : index
    %103 = vector.load %arg13[%c0_73, %c0_74] : memref<1x64xf32, #tpu.memory_space<vmem>>, vector<1x64xf32>
    %104 = vector.broadcast %103 : vector<1x64xf32> to vector<8x64xf32>
    %105 = arith.addf %102, %104 : vector<8x64xf32>
    %cst_75 = arith.constant 0.000000e+00 : f32
    %106 = vector.broadcast %cst_75 : f32 to vector<8x64xf32>
    %107 = arith.maximumf %105, %106 : vector<8x64xf32>
    %c0_76 = arith.constant 0 : index
    %c0_77 = arith.constant 0 : index
    %108 = vector.load %arg14[%c0_76, %c0_77] : memref<64x32xf32, #tpu.memory_space<vmem>>, vector<64x32xf32>
    %cst_78 = arith.constant dense<0.000000e+00> : vector<8x32xf32>
    %109 = tpu.matmul %107, %108, %cst_78 {dimension_numbers = #tpu.dot_dimension_numbers<[1], [0], [0], [1], [0, 0, 1, 1], [], []>} : vector<8x64xf32>, vector<64x32xf32>, vector<8x32xf32> -> vector<8x32xf32>
    %c0_79 = arith.constant 0 : index
    %c0_80 = arith.constant 0 : index
    %110 = vector.load %arg15[%c0_79, %c0_80] : memref<1x32xf32, #tpu.memory_space<vmem>>, vector<1x32xf32>
    %111 = vector.broadcast %110 : vector<1x32xf32> to vector<8x32xf32>
    %112 = arith.addf %109, %111 : vector<8x32xf32>
    %113 = arith.addf %100, %112 : vector<8x32xf32>
    %cst_81 = arith.constant dense<0.000000e+00> : vector<8xf32>
    %114 = vector.multi_reduction <add>, %113, %cst_81 [1] : vector<8x32xf32> to vector<8xf32>
    %115 = vector.shape_cast %114 : vector<8xf32> to vector<8x1xf32>
    %cst_82 = arith.constant 3.200000e+01 : f32
    %116 = vector.broadcast %cst_82 : f32 to vector<8x1xf32>
    %117 = arith.divf %115, %116 : vector<8x1xf32>
    %118 = vector.broadcast %117 : vector<8x1xf32> to vector<8x32xf32>
    %119 = arith.subf %113, %118 : vector<8x32xf32>
    %120 = arith.mulf %119, %119 : vector<8x32xf32>
    %cst_83 = arith.constant dense<0.000000e+00> : vector<8xf32>
    %121 = vector.multi_reduction <add>, %120, %cst_83 [1] : vector<8x32xf32> to vector<8xf32>
    %122 = vector.shape_cast %121 : vector<8xf32> to vector<8x1xf32>
    %cst_84 = arith.constant 3.200000e+01 : f32
    %123 = vector.broadcast %cst_84 : f32 to vector<8x1xf32>
    %124 = arith.divf %122, %123 : vector<8x1xf32>
    %cst_85 = arith.constant 9.99999974E-6 : f32
    %125 = vector.broadcast %cst_85 : f32 to vector<8x1xf32>
    %126 = arith.addf %124, %125 : vector<8x1xf32>
    %127 = math.rsqrt %126 : vector<8x1xf32>
    %128 = vector.broadcast %127 : vector<8x1xf32> to vector<8x32xf32>
    %129 = arith.mulf %119, %128 : vector<8x32xf32>
    %130 = vector.broadcast %78 : vector<1x32xf32> to vector<8x32xf32>
    %131 = arith.mulf %129, %130 : vector<8x32xf32>
    %132 = vector.broadcast %79 : vector<1x32xf32> to vector<8x32xf32>
    %133 = arith.addf %131, %132 : vector<8x32xf32>
    %134 = vector.extract_strided_slice %133 {offsets = [0, 0], sizes = [1, 32], strides = [1, 1]} : vector<8x32xf32> to vector<1x32xf32>
    %c0_86 = arith.constant 0 : index
    %c0_87 = arith.constant 0 : index
    %135 = vector.load %arg16[%c0_86, %c0_87] : memref<32x1xf32, #tpu.memory_space<vmem>>, vector<32x1xf32>
    %cst_88 = arith.constant dense<0.000000e+00> : vector<1x1xf32>
    %136 = tpu.matmul %134, %135, %cst_88 {dimension_numbers = #tpu.dot_dimension_numbers<[1], [0], [0], [1], [0, 0, 1, 1], [], []>} : vector<1x32xf32>, vector<32x1xf32>, vector<1x1xf32> -> vector<1x1xf32>
    %c0_89 = arith.constant 0 : index
    %c0_90 = arith.constant 0 : index
    %137 = vector.load %arg17[%c0_89, %c0_90] : memref<1x1xf32, #tpu.memory_space<vmem>>, vector<1x1xf32>
    %138 = arith.addf %136, %137 : vector<1x1xf32>
    %139 = arith.negf %138 : vector<1x1xf32>
    %140 = math.exp %139 : vector<1x1xf32>
    %cst_91 = arith.constant 1.000000e+00 : f32
    %141 = vector.broadcast %cst_91 : f32 to vector<1x1xf32>
    %142 = arith.addf %141, %140 : vector<1x1xf32>
    %143 = arith.divf %141, %142 : vector<1x1xf32>
    %144 = vector.shape_cast %143 : vector<1x1xf32> to vector<1x1x1xf32>
    %145 = vector.broadcast %144 : vector<1x1x1xf32> to vector<1x8x128xf32>
    %c0_92 = arith.constant 0 : index
    %c0_93 = arith.constant 0 : index
    %c0_94 = arith.constant 0 : index
    %146 = vector.load %arg18[%c0_92, %c0_93, %c0_94] : memref<1x8x128xf32, #tpu.memory_space<vmem>>, vector<1x8x128xf32>
    tpu.vector_store %arg18[%c0_92, %c0_93, %c0_94], %145 {strides = array<i32>} : memref<1x8x128xf32, #tpu.memory_space<vmem>>, vector<1x8x128xf32>,
    return
  }
  func.func @transform_0(%arg0: i32) -> (i32, i32, i32) {
    %c0_i32 = arith.constant 0 : i32
    %c0_i32_0 = arith.constant 0 : i32
    %c0_i32_1 = arith.constant 0 : i32
    return %arg0, %c0_i32, %c0_i32_0 : i32, i32, i32
  }
  func.func @transform_1(%arg0: i32) -> (i32, i32, i32) {
    %c0_i32 = arith.constant 0 : i32
    %c0_i32_0 = arith.constant 0 : i32
    %c0_i32_1 = arith.constant 0 : i32
    %c0_i32_2 = arith.constant 0 : i32
    return %c0_i32, %c0_i32_0, %c0_i32_1 : i32, i32, i32
  }
  func.func @transform_2(%arg0: i32) -> (i32, i32, i32) {
    %c0_i32 = arith.constant 0 : i32
    %c0_i32_0 = arith.constant 0 : i32
    %c0_i32_1 = arith.constant 0 : i32
    %c0_i32_2 = arith.constant 0 : i32
    return %c0_i32, %c0_i32_0, %c0_i32_1 : i32, i32, i32
  }
  func.func @transform_3(%arg0: i32) -> (i32, i32, i32) {
    %c0_i32 = arith.constant 0 : i32
    %c0_i32_0 = arith.constant 0 : i32
    %c0_i32_1 = arith.constant 0 : i32
    %c0_i32_2 = arith.constant 0 : i32
    return %c0_i32, %c0_i32_0, %c0_i32_1 : i32, i32, i32
  }
  func.func @transform_4(%arg0: i32) -> (i32, i32, i32) {
    %c0_i32 = arith.constant 0 : i32
    %c0_i32_0 = arith.constant 0 : i32
    %c0_i32_1 = arith.constant 0 : i32
    %c0_i32_2 = arith.constant 0 : i32
    return %c0_i32, %c0_i32_0, %c0_i32_1 : i32, i32, i32
  }
  func.func @transform_5(%arg0: i32) -> (i32, i32, i32) {
    %c0_i32 = arith.constant 0 : i32
    %c0_i32_0 = arith.constant 0 : i32
    %c0_i32_1 = arith.constant 0 : i32
    %c0_i32_2 = arith.constant 0 : i32
    return %c0_i32, %c0_i32_0, %c0_i32_1 : i32, i32, i32
  }
  func.func @transform_6(%arg0: i32) -> (i32, i32, i32) {
    %c0_i32 = arith.constant 0 : i32
    %c0_i32_0 = arith.constant 0 : i32
    %c0_i32_1 = arith.constant 0 : i32
    %c0_i32_2 = arith.constant 0 : i32
    return %c0_i32, %c0_i32_0, %c0_i32_1 : i32, i32, i32
  }
  func.func @transform_7(%arg0: i32) -> (i32, i32, i32) {
    %c0_i32 = arith.constant 0 : i32
    %c0_i32_0 = arith.constant 0 : i32
    %c0_i32_1 = arith.constant 0 : i32
    %c0_i32_2 = arith.constant 0 : i32
    return %c0_i32, %c0_i32_0, %c0_i32_1 : i32, i32, i32
  }
  func.func @transform_8(%arg0: i32) -> (i32, i32) {
    %c0_i32 = arith.constant 0 : i32
    %c0_i32_0 = arith.constant 0 : i32
    %c0_i32_1 = arith.constant 0 : i32
    return %c0_i32, %c0_i32_0 : i32, i32
  }
  func.func @transform_9(%arg0: i32) -> (i32, i32) {
    %c0_i32 = arith.constant 0 : i32
    %c0_i32_0 = arith.constant 0 : i32
    %c0_i32_1 = arith.constant 0 : i32
    return %c0_i32, %c0_i32_0 : i32, i32
  }
  func.func @transform_10(%arg0: i32) -> (i32, i32) {
    %c0_i32 = arith.constant 0 : i32
    %c0_i32_0 = arith.constant 0 : i32
    %c0_i32_1 = arith.constant 0 : i32
    return %c0_i32, %c0_i32_0 : i32, i32
  }
  func.func @transform_11(%arg0: i32) -> (i32, i32) {
    %c0_i32 = arith.constant 0 : i32
    %c0_i32_0 = arith.constant 0 : i32
    %c0_i32_1 = arith.constant 0 : i32
    return %c0_i32, %c0_i32_0 : i32, i32
  }
  func.func @transform_12(%arg0: i32) -> (i32, i32) {
    %c0_i32 = arith.constant 0 : i32
    %c0_i32_0 = arith.constant 0 : i32
    %c0_i32_1 = arith.constant 0 : i32
    return %c0_i32, %c0_i32_0 : i32, i32
  }
  func.func @transform_13(%arg0: i32) -> (i32, i32) {
    %c0_i32 = arith.constant 0 : i32
    %c0_i32_0 = arith.constant 0 : i32
    %c0_i32_1 = arith.constant 0 : i32
    return %c0_i32, %c0_i32_0 : i32, i32
  }
  func.func @transform_14(%arg0: i32) -> (i32, i32) {
    %c0_i32 = arith.constant 0 : i32
    %c0_i32_0 = arith.constant 0 : i32
    %c0_i32_1 = arith.constant 0 : i32
    return %c0_i32, %c0_i32_0 : i32, i32
  }
  func.func @transform_15(%arg0: i32) -> (i32, i32) {
    %c0_i32 = arith.constant 0 : i32
    %c0_i32_0 = arith.constant 0 : i32
    %c0_i32_1 = arith.constant 0 : i32
    return %c0_i32, %c0_i32_0 : i32, i32
  }
  func.func @transform_16(%arg0: i32) -> (i32, i32) {
    %c0_i32 = arith.constant 0 : i32
    %c0_i32_0 = arith.constant 0 : i32
    %c0_i32_1 = arith.constant 0 : i32
    return %c0_i32, %c0_i32_0 : i32, i32
  }
  func.func @transform_17(%arg0: i32) -> (i32, i32, i32) {
    %c0_i32 = arith.constant 0 : i32
    %c0_i32_0 = arith.constant 0 : i32
    %c0_i32_1 = arith.constant 0 : i32
    return %arg0, %c0_i32, %c0_i32_0 : i32, i32, i32
  }
}

</mosaic_0001>

<llo_original>
// kernel: classification_transformer.1
$region0: #{classification_transformer.1}
  #allocation0 [shape = 'u32[]', space=smem, size = 0x4, offset = 0x4, fixed_abs, tag = 'smem constant byte address 0x4 - core index']
  #allocation1 [shape = 'u32[144,128]{1,0:T(1,128)}', space=vmem, size = 0x12000, scoped, tag = 'internal scratch']
  #allocation2 [shape = 'f32[1,1]{1,0:T(1,128)S(1)}', space=vmem, size = 0x200, scoped, tag = 'scoped memory for classification_transformer.1']
  %s0 = inlined_call_operand.vmem [shape: f32[2,8,32], index: 0, kind: input, shape index: {}]
  %s1 = inlined_call_operand.vmem [shape: f32[2,32,16], index: 1, kind: input, shape index: {}]
  %s2 = inlined_call_operand.vmem [shape: f32[2,1,16], index: 2, kind: input, shape index: {}]
  %s3 = inlined_call_operand.vmem [shape: f32[2,32,16], index: 3, kind: input, shape index: {}]
  %s4 = inlined_call_operand.vmem [shape: f32[2,1,16], index: 4, kind: input, shape index: {}]
  %s5 = inlined_call_operand.vmem [shape: f32[2,32,16], index: 5, kind: input, shape index: {}]
  %s6 = inlined_call_operand.vmem [shape: f32[2,1,16], index: 6, kind: input, shape index: {}]
  %s7 = inlined_call_operand.vmem [shape: f32[2,16,32], index: 7, kind: input, shape index: {}]
  %s8 = inlined_call_operand.vmem [shape: f32[1,32], index: 8, kind: input, shape index: {}]
  %s9 = inlined_call_operand.vmem [shape: f32[1,32], index: 9, kind: input, shape index: {}]
  %s10 = inlined_call_operand.vmem [shape: f32[1,32], index: 10, kind: input, shape index: {}]
  %s11 = inlined_call_operand.vmem [shape: f32[32,64], index: 11, kind: input, shape index: {}]
  %s12 = inlined_call_operand.vmem [shape: f32[1,64], index: 12, kind: input, shape index: {}]
  %s13 = inlined_call_operand.vmem [shape: f32[64,32], index: 13, kind: input, shape index: {}]
  %s14 = inlined_call_operand.vmem [shape: f32[1,32], index: 14, kind: input, shape index: {}]
  %s15 = inlined_call_operand.vmem [shape: f32[32,1], index: 15, kind: input, shape index: {}]
  %s16 = inlined_call_operand.<no memory space> [shape: f32[1,1], index: 16, kind: input, shape index: {}]
  %s17 = inlined_call_operand.vmem [shape: f32[2,8,128], index: 17, kind: output, shape index: {}]
  %s18 = sld [smem:[#allocation0]]
  $region101: #{classification_transformer.1} parent=0
    _
  %s20 = ssub.s32 1, %s18
  %s21 = scalar_select 0, %s20, %s18
  %v22 = vstv %s16
  %23 = vst [vmem:[#allocation2] sm:$0x1] %v22
  loop: start=0, step=1, limit=4
  $region2: #{classification_transformer.1} parent=0 // loop_pre_header
    _
  $region3: #{classification_transformer.1} parent=0 // loop_header
    %s25 = sphi 0, %s29
    %p26 = scmp.ge.s32.totalorder %s25, 4
    %s35 = sphi 0, %s37
    %s38 = sphi 0, %s35
    %s39 = sphi 0, %s38
    %s55 = sphi 0, %s39
    %s59 = sphi 0, %s59
    %s61 = sphi 0, %s59
    %s62 = sphi 0, %s61
    %s76 = sphi 0, %s62
    %s80 = sphi 0, %s80
    %s82 = sphi 0, %s80
    %s83 = sphi 0, %s82
    %s97 = sphi 0, %s83
    %s101 = sphi 0, %s101
    %s103 = sphi 0, %s101
    %s104 = sphi 0, %s103
    %s118 = sphi 0, %s104
    %s122 = sphi 0, %s122
    %s124 = sphi 0, %s122
    %s125 = sphi 0, %s124
    %s139 = sphi 0, %s125
    %s143 = sphi 0, %s143
    %s145 = sphi 0, %s143
    %s146 = sphi 0, %s145
    %s160 = sphi 0, %s146
    %s164 = sphi 0, %s164
    %s166 = sphi 0, %s164
    %s167 = sphi 0, %s166
    %s181 = sphi 0, %s167
    %s185 = sphi 0, %s185
    %s187 = sphi 0, %s185
    %s188 = sphi 0, %s187
    %s202 = sphi 0, %s188
    %s206 = sphi 0, %s206
    %s208 = sphi 0, %s206
    %s209 = sphi 0, %s208
    %s223 = sphi 0, %s209
    %s227 = sphi 0, %s227
    %s229 = sphi 0, %s227
    %s230 = sphi 0, %s229
    %s244 = sphi 0, %s230
    %s248 = sphi 0, %s248
    %s250 = sphi 0, %s248
    %s251 = sphi 0, %s250
    %s265 = sphi 0, %s251
    %s269 = sphi 0, %s269
    %s271 = sphi 0, %s269
    %s272 = sphi 0, %s271
    %s286 = sphi 0, %s272
    %s290 = sphi 0, %s290
    %s292 = sphi 0, %s290
    %s293 = sphi 0, %s292
    %s307 = sphi 0, %s293
    %s311 = sphi 0, %s311
    %s313 = sphi 0, %s311
    %s314 = sphi 0, %s313
    %s328 = sphi 0, %s314
    %s332 = sphi 0, %s332
    %s334 = sphi 0, %s332
    %s335 = sphi 0, %s334
    %s349 = sphi 0, %s335
    %s353 = sphi 0, %s353
    %s355 = sphi 0, %s353
    %s356 = sphi 0, %s355
    %s370 = sphi 0, %s356
    %s374 = sphi 0, %s374
    %s376 = sphi 0, %s374
    %s377 = sphi 0, %s376
    %s391 = sphi 0, %s377
    %s397 = sphi 0, %s399
    %s400 = sphi 0, %s397
    %s401 = sphi 0, %s400
    %s417 = sphi 0, %s401
  $region4: #{classification_transformer.1} parent=0 // loop_header_branch
    %28 = sbr.rel (%p26) target = $region8
  $region5: #{classification_transformer.1} parent=0 // loop_body
    %s30 = ssub.s32 %s25, 1
    %s31 = ssub.s32 %s25, 2
    %s32 = sadd.s32 %s25, 1
    %s33 = ssub.s32 %s25, %s32
    %p34 = scmp.eq.s32.totalorder %s33, 0
    %s36 = sadd.s32 %s35, 1
    %s37 = scalar_select %p34, %s35, %s36
    %p40 = pneg %p34
    %p41 = scmp.eq.s32.totalorder %s25, 1
    %p42 = por %p40, %p41
    %p43 = scmp.ne.s32.totalorder %s35, %s38
    %p44 = scmp.eq.s32.totalorder %s25, 0
    %p45 = por %p43, %p44
    %p46 = scmp.ne.s32.totalorder %s35, %s38
    %p47 = scmp.eq.s32.totalorder %s30, 1
    %p48 = por %p46, %p47
    %p49 = scmp.ne.s32.totalorder %s38, %s39
    %p50 = scmp.eq.s32.totalorder %s30, 0
    %p51 = por %p49, %p50
    %p52 = scmp.ne.s32.totalorder %s38, %s39
    %p53 = scmp.eq.s32.totalorder %s31, 1
    %p54 = por %p52, %p53
    %p56 = scmp.ne.s32.totalorder %s39, %s55
    %p57 = scmp.eq.s32.totalorder %s31, 0
    %p58 = por %p56, %p57
    %s60 = sadd.s32 %s59, 1
    %p63 = scmp.eq.s32.totalorder %s25, 1
    %p64 = scmp.ne.s32.totalorder %s59, %s61
    %p65 = scmp.eq.s32.totalorder %s25, 0
    %p66 = por %p64, %p65
    %p67 = scmp.ne.s32.totalorder %s59, %s61
    %p68 = scmp.eq.s32.totalorder %s30, 1
    %p69 = por %p67, %p68
    %p70 = scmp.ne.s32.totalorder %s61, %s62
    %p71 = scmp.eq.s32.totalorder %s30, 0
    %p72 = por %p70, %p71
    %p73 = scmp.ne.s32.totalorder %s61, %s62
    %p74 = scmp.eq.s32.totalorder %s31, 1
    %p75 = por %p73, %p74
    %p77 = scmp.ne.s32.totalorder %s62, %s76
    %p78 = scmp.eq.s32.totalorder %s31, 0
    %p79 = por %p77, %p78
    %s81 = sadd.s32 %s80, 1
    %p84 = scmp.eq.s32.totalorder %s25, 1
    %p85 = scmp.ne.s32.totalorder %s80, %s82
    %p86 = scmp.eq.s32.totalorder %s25, 0
    %p87 = por %p85, %p86
    %p88 = scmp.ne.s32.totalorder %s80, %s82
    %p89 = scmp.eq.s32.totalorder %s30, 1
    %p90 = por %p88, %p89
    %p91 = scmp.ne.s32.totalorder %s82, %s83
    %p92 = scmp.eq.s32.totalorder %s30, 0
    %p93 = por %p91, %p92
    %p94 = scmp.ne.s32.totalorder %s82, %s83
    %p95 = scmp.eq.s32.totalorder %s31, 1
    %p96 = por %p94, %p95
    %p98 = scmp.ne.s32.totalorder %s83, %s97
    %p99 = scmp.eq.s32.totalorder %s31, 0
    %p100 = por %p98, %p99
    %s102 = sadd.s32 %s101, 1
    %p105 = scmp.eq.s32.totalorder %s25, 1
    %p106 = scmp.ne.s32.totalorder %s101, %s103
    %p107 = scmp.eq.s32.totalorder %s25, 0
    %p108 = por %p106, %p107
    %p109 = scmp.ne.s32.totalorder %s101, %s103
    %p110 = scmp.eq.s32.totalorder %s30, 1
    %p111 = por %p109, %p110
    %p112 = scmp.ne.s32.totalorder %s103, %s104
    %p113 = scmp.eq.s32.totalorder %s30, 0
    %p114 = por %p112, %p113
    %p115 = scmp.ne.s32.totalorder %s103, %s104
    %p116 = scmp.eq.s32.totalorder %s31, 1
    %p117 = por %p115, %p116
    %p119 = scmp.ne.s32.totalorder %s104, %s118
    %p120 = scmp.eq.s32.totalorder %s31, 0
    %p121 = por %p119, %p120
    %s123 = sadd.s32 %s122, 1
    %p126 = scmp.eq.s32.totalorder %s25, 1
    %p127 = scmp.ne.s32.totalorder %s122, %s124
    %p128 = scmp.eq.s32.totalorder %s25, 0
    %p129 = por %p127, %p128
    %p130 = scmp.ne.s32.totalorder %s122, %s124
    %p131 = scmp.eq.s32.totalorder %s30, 1
    %p132 = por %p130, %p131
    %p133 = scmp.ne.s32.totalorder %s124, %s125
    %p134 = scmp.eq.s32.totalorder %s30, 0
    %p135 = por %p133, %p134
    %p136 = scmp.ne.s32.totalorder %s124, %s125
    %p137 = scmp.eq.s32.totalorder %s31, 1
    %p138 = por %p136, %p137
    %p140 = scmp.ne.s32.totalorder %s125, %s139
    %p141 = scmp.eq.s32.totalorder %s31, 0
    %p142 = por %p140, %p141
    %s144 = sadd.s32 %s143, 1
    %p147 = scmp.eq.s32.totalorder %s25, 1
    %p148 = scmp.ne.s32.totalorder %s143, %s145
    %p149 = scmp.eq.s32.totalorder %s25, 0
    %p150 = por %p148, %p149
    %p151 = scmp.ne.s32.totalorder %s143, %s145
    %p152 = scmp.eq.s32.totalorder %s30, 1
    %p153 = por %p151, %p152
    %p154 = scmp.ne.s32.totalorder %s145, %s146
    %p155 = scmp.eq.s32.totalorder %s30, 0
    %p156 = por %p154, %p155
    %p157 = scmp.ne.s32.totalorder %s145, %s146
    %p158 = scmp.eq.s32.totalorder %s31, 1
    %p159 = por %p157, %p158
    %p161 = scmp.ne.s32.totalorder %s146, %s160
    %p162 = scmp.eq.s32.totalorder %s31, 0
    %p163 = por %p161, %p162
    %s165 = sadd.s32 %s164, 1
    %p168 = scmp.eq.s32.totalorder %s25, 1
    %p169 = scmp.ne.s32.totalorder %s164, %s166
    %p170 = scmp.eq.s32.totalorder %s25, 0
    %p171 = por %p169, %p170
    %p172 = scmp.ne.s32.totalorder %s164, %s166
    %p173 = scmp.eq.s32.totalorder %s30, 1
    %p174 = por %p172, %p173
    %p175 = scmp.ne.s32.totalorder %s166, %s167
    %p176 = scmp.eq.s32.totalorder %s30, 0
    %p177 = por %p175, %p176
    %p178 = scmp.ne.s32.totalorder %s166, %s167
    %p179 = scmp.eq.s32.totalorder %s31, 1
    %p180 = por %p178, %p179
    %p182 = scmp.ne.s32.totalorder %s167, %s181
    %p183 = scmp.eq.s32.totalorder %s31, 0
    %p184 = por %p182, %p183
    %s186 = sadd.s32 %s185, 1
    %p189 = scmp.eq.s32.totalorder %s25, 1
    %p190 = scmp.ne.s32.totalorder %s185, %s187
    %p191 = scmp.eq.s32.totalorder %s25, 0
    %p192 = por %p190, %p191
    %p193 = scmp.ne.s32.totalorder %s185, %s187
    %p194 = scmp.eq.s32.totalorder %s30, 1
    %p195 = por %p193, %p194
    %p196 = scmp.ne.s32.totalorder %s187, %s188
    %p197 = scmp.eq.s32.totalorder %s30, 0
    %p198 = por %p196, %p197
    %p199 = scmp.ne.s32.totalorder %s187, %s188
    %p200 = scmp.eq.s32.totalorder %s31, 1
    %p201 = por %p199, %p200
    %p203 = scmp.ne.s32.totalorder %s188, %s202
    %p204 = scmp.eq.s32.totalorder %s31, 0
    %p205 = por %p203, %p204
    %s207 = sadd.s32 %s206, 1
    %p210 = scmp.eq.s32.totalorder %s25, 1
    %p211 = scmp.ne.s32.totalorder %s206, %s208
    %p212 = scmp.eq.s32.totalorder %s25, 0
    %p213 = por %p211, %p212
    %p214 = scmp.ne.s32.totalorder %s206, %s208
    %p215 = scmp.eq.s32.totalorder %s30, 1
    %p216 = por %p214, %p215
    %p217 = scmp.ne.s32.totalorder %s208, %s209
    %p218 = scmp.eq.s32.totalorder %s30, 0
    %p219 = por %p217, %p218
    %p220 = scmp.ne.s32.totalorder %s208, %s209
    %p221 = scmp.eq.s32.totalorder %s31, 1
    %p222 = por %p220, %p221
    %p224 = scmp.ne.s32.totalorder %s209, %s223
    %p225 = scmp.eq.s32.totalorder %s31, 0
    %p226 = por %p224, %p225
    %s228 = sadd.s32 %s227, 1
    %p231 = scmp.eq.s32.totalorder %s25, 1
    %p232 = scmp.ne.s32.totalorder %s227, %s229
    %p233 = scmp.eq.s32.totalorder %s25, 0
    %p234 = por %p232, %p233
    %p235 = scmp.ne.s32.totalorder %s227, %s229
    %p236 = scmp.eq.s32.totalorder %s30, 1
    %p237 = por %p235, %p236
    %p238 = scmp.ne.s32.totalorder %s229, %s230
    %p239 = scmp.eq.s32.totalorder %s30, 0
    %p240 = por %p238, %p239
    %p241 = scmp.ne.s32.totalorder %s229, %s230
    %p242 = scmp.eq.s32.totalorder %s31, 1
    %p243 = por %p241, %p242
    %p245 = scmp.ne.s32.totalorder %s230, %s244
    %p246 = scmp.eq.s32.totalorder %s31, 0
    %p247 = por %p245, %p246
    %s249 = sadd.s32 %s248, 1
    %p252 = scmp.eq.s32.totalorder %s25, 1
    %p253 = scmp.ne.s32.totalorder %s248, %s250
    %p254 = scmp.eq.s32.totalorder %s25, 0
    %p255 = por %p253, %p254
    %p256 = scmp.ne.s32.totalorder %s248, %s250
    %p257 = scmp.eq.s32.totalorder %s30, 1
    %p258 = por %p256, %p257
    %p259 = scmp.ne.s32.totalorder %s250, %s251
    %p260 = scmp.eq.s32.totalorder %s30, 0
    %p261 = por %p259, %p260
    %p262 = scmp.ne.s32.totalorder %s250, %s251
    %p263 = scmp.eq.s32.totalorder %s31, 1
    %p264 = por %p262, %p263
    %p266 = scmp.ne.s32.totalorder %s251, %s265
    %p267 = scmp.eq.s32.totalorder %s31, 0
    %p268 = por %p266, %p267
    %s270 = sadd.s32 %s269, 1
    %p273 = scmp.eq.s32.totalorder %s25, 1
    %p274 = scmp.ne.s32.totalorder %s269, %s271
    %p275 = scmp.eq.s32.totalorder %s25, 0
    %p276 = por %p274, %p275
    %p277 = scmp.ne.s32.totalorder %s269, %s271
    %p278 = scmp.eq.s32.totalorder %s30, 1
    %p279 = por %p277, %p278
    %p280 = scmp.ne.s32.totalorder %s271, %s272
    %p281 = scmp.eq.s32.totalorder %s30, 0
    %p282 = por %p280, %p281
    %p283 = scmp.ne.s32.totalorder %s271, %s272
    %p284 = scmp.eq.s32.totalorder %s31, 1
    %p285 = por %p283, %p284
    %p287 = scmp.ne.s32.totalorder %s272, %s286
    %p288 = scmp.eq.s32.totalorder %s31, 0
    %p289 = por %p287, %p288
    %s291 = sadd.s32 %s290, 1
    %p294 = scmp.eq.s32.totalorder %s25, 1
    %p295 = scmp.ne.s32.totalorder %s290, %s292
    %p296 = scmp.eq.s32.totalorder %s25, 0
    %p297 = por %p295, %p296
    %p298 = scmp.ne.s32.totalorder %s290, %s292
    %p299 = scmp.eq.s32.totalorder %s30, 1
    %p300 = por %p298, %p299
    %p301 = scmp.ne.s32.totalorder %s292, %s293
    %p302 = scmp.eq.s32.totalorder %s30, 0
    %p303 = por %p301, %p302
    %p304 = scmp.ne.s32.totalorder %s292, %s293
    %p305 = scmp.eq.s32.totalorder %s31, 1
    %p306 = por %p304, %p305
    %p308 = scmp.ne.s32.totalorder %s293, %s307
    %p309 = scmp.eq.s32.totalorder %s31, 0
    %p310 = por %p308, %p309
    %s312 = sadd.s32 %s311, 1
    %p315 = scmp.eq.s32.totalorder %s25, 1
    %p316 = scmp.ne.s32.totalorder %s311, %s313
    %p317 = scmp.eq.s32.totalorder %s25, 0
    %p318 = por %p316, %p317
    %p319 = scmp.ne.s32.totalorder %s311, %s313
    %p320 = scmp.eq.s32.totalorder %s30, 1
    %p321 = por %p319, %p320
    %p322 = scmp.ne.s32.totalorder %s313, %s314
    %p323 = scmp.eq.s32.totalorder %s30, 0
    %p324 = por %p322, %p323
    %p325 = scmp.ne.s32.totalorder %s313, %s314
    %p326 = scmp.eq.s32.totalorder %s31, 1
    %p327 = por %p325, %p326
    %p329 = scmp.ne.s32.totalorder %s314, %s328
    %p330 = scmp.eq.s32.totalorder %s31, 0
    %p331 = por %p329, %p330
    %s333 = sadd.s32 %s332, 1
    %p336 = scmp.eq.s32.totalorder %s25, 1
    %p337 = scmp.ne.s32.totalorder %s332, %s334
    %p338 = scmp.eq.s32.totalorder %s25, 0
    %p339 = por %p337, %p338
    %p340 = scmp.ne.s32.totalorder %s332, %s334
    %p341 = scmp.eq.s32.totalorder %s30, 1
    %p342 = por %p340, %p341
    %p343 = scmp.ne.s32.totalorder %s334, %s335
    %p344 = scmp.eq.s32.totalorder %s30, 0
    %p345 = por %p343, %p344
    %p346 = scmp.ne.s32.totalorder %s334, %s335
    %p347 = scmp.eq.s32.totalorder %s31, 1
    %p348 = por %p346, %p347
    %p350 = scmp.ne.s32.totalorder %s335, %s349
    %p351 = scmp.eq.s32.totalorder %s31, 0
    %p352 = por %p350, %p351
    %s354 = sadd.s32 %s353, 1
    %p357 = scmp.eq.s32.totalorder %s25, 1
    %p358 = scmp.ne.s32.totalorder %s353, %s355
    %p359 = scmp.eq.s32.totalorder %s25, 0
    %p360 = por %p358, %p359
    %p361 = scmp.ne.s32.totalorder %s353, %s355
    %p362 = scmp.eq.s32.totalorder %s30, 1
    %p363 = por %p361, %p362
    %p364 = scmp.ne.s32.totalorder %s355, %s356
    %p365 = scmp.eq.s32.totalorder %s30, 0
    %p366 = por %p364, %p365
    %p367 = scmp.ne.s32.totalorder %s355, %s356
    %p368 = scmp.eq.s32.totalorder %s31, 1
    %p369 = por %p367, %p368
    %p371 = scmp.ne.s32.totalorder %s356, %s370
    %p372 = scmp.eq.s32.totalorder %s31, 0
    %p373 = por %p371, %p372
    %s375 = sadd.s32 %s374, 1
    %p378 = scmp.eq.s32.totalorder %s25, 1
    %p379 = scmp.ne.s32.totalorder %s374, %s376
    %p380 = scmp.eq.s32.totalorder %s25, 0
    %p381 = por %p379, %p380
    %p382 = scmp.ne.s32.totalorder %s374, %s376
    %p383 = scmp.eq.s32.totalorder %s30, 1
    %p384 = por %p382, %p383
    %p385 = scmp.ne.s32.totalorder %s376, %s377
    %p386 = scmp.eq.s32.totalorder %s30, 0
    %p387 = por %p385, %p386
    %p388 = scmp.ne.s32.totalorder %s376, %s377
    %p389 = scmp.eq.s32.totalorder %s31, 1
    %p390 = por %p388, %p389
    %p392 = scmp.ne.s32.totalorder %s377, %s391
    %p393 = scmp.eq.s32.totalorder %s31, 0
    %p394 = por %p392, %p393
    %s395 = ssub.s32 %s25, %s32
    %p396 = scmp.eq.s32.totalorder %s395, 0
    %s398 = sadd.s32 %s397, 1
    %s399 = scalar_select %p396, %s397, %s398
    %p402 = pneg %p396
    %p403 = scmp.eq.s32.totalorder %s25, 1
    %p404 = por %p402, %p403
    %p405 = scmp.ne.s32.totalorder %s397, %s400
    %p406 = scmp.eq.s32.totalorder %s25, 0
    %p407 = por %p405, %p406
    %p408 = scmp.ne.s32.totalorder %s397, %s400
    %p409 = scmp.eq.s32.totalorder %s30, 1
    %p410 = por %p408, %p409
    %p411 = scmp.ne.s32.totalorder %s400, %s401
    %p412 = scmp.eq.s32.totalorder %s30, 0
    %p413 = por %p411, %p412
    %p414 = scmp.ne.s32.totalorder %s400, %s401
    %p415 = scmp.eq.s32.totalorder %s31, 1
    %p416 = por %p414, %p415
    %p418 = scmp.ne.s32.totalorder %s401, %s417
    %p419 = scmp.eq.s32.totalorder %s31, 0
    %p420 = por %p418, %p419
    %p421 = scmp.le.s32.totalorder 1, %s25
    %p422 = scmp.lt.s32.totalorder %s25, 3
    %p423 = pnand %p421, %p422
    %p424 = pneg %p423
    // Predicated region
    $region9: #{classification_transformer.1} parent=5 // pred_check
      _
    $region10: #{classification_transformer.1} parent=5 // pred_check_branch
      %426 = sbr.rel (%p423) target = $region12
    $region11: #{classification_transformer.1} parent=5 // pred_region
      %s427 = ssub.s32 %s25, 1
      // Predicated region
      $region13: #{classification_transformer.1} parent=11 // pred_check
        %p428 = pneg %p72
      $region14: #{classification_transformer.1} parent=11 // pred_check_branch
        %430 = sbr.rel (%p428) target = $region16
      $region15: #{classification_transformer.1} parent=11 // pred_region
        _
      $region16: #{classification_transformer.1} parent=11 // pred_fallthru
        _
      // Predicated region
      $region17: #{classification_transformer.1} parent=11 // pred_check
        %p431 = pneg %p93
      $region18: #{classification_transformer.1} parent=11 // pred_check_branch
        %433 = sbr.rel (%p431) target = $region20
      $region19: #{classification_transformer.1} parent=11 // pred_region
        _
      $region20: #{classification_transformer.1} parent=11 // pred_fallthru
        _
      // Predicated region
      $region21: #{classification_transformer.1} parent=11 // pred_check
        %p434 = pneg %p114
      $region22: #{classification_transformer.1} parent=11 // pred_check_branch
        %436 = sbr.rel (%p434) target = $region24
      $region23: #{classification_transformer.1} parent=11 // pred_region
        _
      $region24: #{classification_transformer.1} parent=11 // pred_fallthru
        _
      // Predicated region
      $region25: #{classification_transformer.1} parent=11 // pred_check
        %p437 = pneg %p135
      $region26: #{classification_transformer.1} parent=11 // pred_check_branch
        %439 = sbr.rel (%p437) target = $region28
      $region27: #{classification_transformer.1} parent=11 // pred_region
        _
      $region28: #{classification_transformer.1} parent=11 // pred_fallthru
        _
      // Predicated region
      $region29: #{classification_transformer.1} parent=11 // pred_check
        %p440 = pneg %p156
      $region30: #{classification_transformer.1} parent=11 // pred_check_branch
        %442 = sbr.rel (%p440) target = $region32
      $region31: #{classification_transformer.1} parent=11 // pred_region
        _
      $region32: #{classification_transformer.1} parent=11 // pred_fallthru
        _
      // Predicated region
      $region33: #{classification_transformer.1} parent=11 // pred_check
        %p443 = pneg %p177
      $region34: #{classification_transformer.1} parent=11 // pred_check_branch
        %445 = sbr.rel (%p443) target = $region36
      $region35: #{classification_transformer.1} parent=11 // pred_region
        _
      $region36: #{classification_transformer.1} parent=11 // pred_fallthru
        _
      // Predicated region
      $region37: #{classification_transformer.1} parent=11 // pred_check
        %p446 = pneg %p198
      $region38: #{classification_transformer.1} parent=11 // pred_check_branch
        %448 = sbr.rel (%p446) target = $region40
      $region39: #{classification_transformer.1} parent=11 // pred_region
        _
      $region40: #{classification_transformer.1} parent=11 // pred_fallthru
        _
      // Predicated region
      $region41: #{classification_transformer.1} parent=11 // pred_check
        %p449 = pneg %p219
      $region42: #{classification_transformer.1} parent=11 // pred_check_branch
        %451 = sbr.rel (%p449) target = $region44
      $region43: #{classification_transformer.1} parent=11 // pred_region
        _
      $region44: #{classification_transformer.1} parent=11 // pred_fallthru
        _
      // Predicated region
      $region45: #{classification_transformer.1} parent=11 // pred_check
        %p452 = pneg %p240
      $region46: #{classification_transformer.1} parent=11 // pred_check_branch
        %454 = sbr.rel (%p452) target = $region48
      $region47: #{classification_transformer.1} parent=11 // pred_region
        _
      $region48: #{classification_transformer.1} parent=11 // pred_fallthru
        _
      // Predicated region
      $region49: #{classification_transformer.1} parent=11 // pred_check
        %p455 = pneg %p261
      $region50: #{classification_transformer.1} parent=11 // pred_check_branch
        %457 = sbr.rel (%p455) target = $region52
      $region51: #{classification_transformer.1} parent=11 // pred_region
        _
      $region52: #{classification_transformer.1} parent=11 // pred_fallthru
        _
      // Predicated region
      $region53: #{classification_transformer.1} parent=11 // pred_check
        %p458 = pneg %p282
      $region54: #{classification_transformer.1} parent=11 // pred_check_branch
        %460 = sbr.rel (%p458) target = $region56
      $region55: #{classification_transformer.1} parent=11 // pred_region
        _
      $region56: #{classification_transformer.1} parent=11 // pred_fallthru
        _
      // Predicated region
      $region57: #{classification_transformer.1} parent=11 // pred_check
        %p461 = pneg %p303
      $region58: #{classification_transformer.1} parent=11 // pred_check_branch
        %463 = sbr.rel (%p461) target = $region60
      $region59: #{classification_transformer.1} parent=11 // pred_region
        _
      $region60: #{classification_transformer.1} parent=11 // pred_fallthru
        _
      // Predicated region
      $region61: #{classification_transformer.1} parent=11 // pred_check
        %p464 = pneg %p324
      $region62: #{classification_transformer.1} parent=11 // pred_check_branch
        %466 = sbr.rel (%p464) target = $region64
      $region63: #{classification_transformer.1} parent=11 // pred_region
        _
      $region64: #{classification_transformer.1} parent=11 // pred_fallthru
        _
      // Predicated region
      $region65: #{classification_transformer.1} parent=11 // pred_check
        %p467 = pneg %p345
      $region66: #{classification_transformer.1} parent=11 // pred_check_branch
        %469 = sbr.rel (%p467) target = $region68
      $region67: #{classification_transformer.1} parent=11 // pred_region
        _
      $region68: #{classification_transformer.1} parent=11 // pred_fallthru
        _
      // Predicated region
      $region69: #{classification_transformer.1} parent=11 // pred_check
        %p470 = pneg %p366
      $region70: #{classification_transformer.1} parent=11 // pred_check_branch
        %472 = sbr.rel (%p470) target = $region72
      $region71: #{classification_transformer.1} parent=11 // pred_region
        _
      $region72: #{classification_transformer.1} parent=11 // pred_fallthru
        _
      // Predicated region
      $region73: #{classification_transformer.1} parent=11 // pred_check
        %p473 = pneg %p387
      $region74: #{classification_transformer.1} parent=11 // pred_check_branch
        %475 = sbr.rel (%p473) target = $region76
      $region75: #{classification_transformer.1} parent=11 // pred_region
        _
      $region76: #{classification_transformer.1} parent=11 // pred_fallthru
        _
    $region12: #{classification_transformer.1} parent=5 // pred_fallthru
      _
    %p476 = scmp.lt.s32.totalorder %s25, 2
    // Predicated region
    $region77: #{classification_transformer.1} parent=5 // pred_check
      %p477 = pneg %p476
    $region78: #{classification_transformer.1} parent=5 // pred_check_branch
      %479 = sbr.rel (%p477) target = $region80
    $region79: #{classification_transformer.1} parent=5 // pred_region
      // Predicated region
      $region81: #{classification_transformer.1} parent=79 // pred_check
        %p480 = pneg %p45
      $region82: #{classification_transformer.1} parent=79 // pred_check_branch
        %482 = sbr.rel (%p480) target = $region84
      $region83: #{classification_transformer.1} parent=79 // pred_region
        %p483 = scmp.lt.s32.totalorder %s25, 1
        %s484 = scalar_select %p483, %s25, 1
        %s485 = smul.addr %s484, 8
        %s486 = scalar_lea.vmem %s0, %s485
      $region84: #{classification_transformer.1} parent=79 // pred_fallthru
        _
    $region80: #{classification_transformer.1} parent=5 // pred_fallthru
      _
    %p487 = scmp.le.s32.totalorder 1, %s25
    %p488 = scmp.lt.s32.totalorder %s25, 3
    %p489 = pnand %p487, %p488
    %p490 = pneg %p489
    // Predicated region
    $region85: #{classification_transformer.1} parent=5 // pred_check
      _
    $region86: #{classification_transformer.1} parent=5 // pred_check_branch
      %492 = sbr.rel (%p489) target = $region88
    $region87: #{classification_transformer.1} parent=5 // pred_region
      %s493 = ssub.s32 %s25, 1
      %p494 = scmp.lt.s32.totalorder %s30, 1
      %s495 = scalar_select %p494, %s30, 1
      %s496 = smul.addr %s495, 8
      %s497 = scalar_lea.vmem %s0, %s496
      %p498 = pneg %p51
      %p499 = pneg %p48
      %p500 = pneg %p72
      %p501 = pneg %p69
      %p502 = pneg %p93
      %p503 = pneg %p90
      %p504 = pneg %p114
      %p505 = pneg %p111
      %p506 = pneg %p135
      %p507 = pneg %p132
      %p508 = pneg %p156
      %p509 = pneg %p153
      %p510 = pneg %p177
      %p511 = pneg %p174
      %p512 = pneg %p198
      %p513 = pneg %p195
      %p514 = pneg %p219
      %p515 = pneg %p216
      %p516 = pneg %p240
      %p517 = pneg %p237
      %p518 = pneg %p261
      %p519 = pneg %p258
      %p520 = pneg %p282
      %p521 = pneg %p279
      %p522 = pneg %p303
      %p523 = pneg %p300
      %p524 = pneg %p324
      %p525 = pneg %p321
      %p526 = pneg %p345
      %p527 = pneg %p342
      %p528 = pneg %p366
      %p529 = pneg %p363
      %p530 = pneg %p387
      %p531 = pneg %p384
      %p532 = pneg %p413
      %p533 = pneg %p410
      %p534 = scmp.lt.s32.totalorder %s30, 1
      %s535 = scalar_select %p534, %s30, 1
      %s536 = smul.addr %s535, 8
      %s537 = scalar_lea.vmem %s17, %s536
      %p538 = scmp.lt.s32.totalorder %s30, 1
      %s539 = scalar_select %p538, %s30, 1
      %s540 = smul.addr %s539, 8
      %s541 = scalar_lea.vmem %s0, %s540
      %p542 = scmp.lt.s32.totalorder %s30, 1
      %s543 = scalar_select %p542, %s30, 1
      %s544 = smul.addr %s543, 8
      %s545 = scalar_lea.vmem %s17, %s544
      %v546 = vld [vmem:[%s541] sm:$0xff]
      %v547 = vld [vmem:[%s1] sm:$0xff]
      %v548 = vld [vmem:[%s1 + $0x8] sm:$0xff]
      %v549 = vld [vmem:[%s1 + $0x10] sm:$0xff]
      %v550 = vld [vmem:[%s1 + $0x18] sm:$0xff]
      %v551 = vld [vmem:[%s2] sm:$0x1]
      %v553 = vlaneseq
      %v554 = vshrl.u32 %v553, 7
      %v555 = vsub.s32 0, %v554
      %v556 = vrot.slane %v551, %v555
      %vm558 = vcmask 261120
      %v560 = vsel %vm558, %v546, 0
      %562 = vmatprep.subr.mxu0 0.0
      %563 = vmatpush1.msra.mxu0 %v547
      %564 = vmatprep.subr.mxu0 0.0
      %565 = vmatpush1.msra.mxu0 %v548
      %566 = vmatprep.subr.mxu0 0.0
      %567 = vmatpush1.msra.mxu0 %v549
      %568 = vmatprep.subr.mxu0 0.0
      %569 = vmatpush1.msra.mxu0 %v550
      %570 = vmatprep.subr.mxu0 0.0
      %571 = vmatpush1.msra.mxu0 0.0
      %572 = vmatprep.subr.mxu0 0.0
      %573 = vmatpush1.msra.mxu0 0.0
      %574 = vmatprep.subr.mxu0 0.0
      %575 = vmatpush1.msra.mxu0 0.0
      %576 = vmatprep.subr.mxu0 0.0
      %577 = vmatpush1.msra.mxu0 0.0
      %578 = vmatprep.subr.mxu0 0.0
      %579 = vmatpush1.msra.mxu0 0.0
      %580 = vmatprep.subr.mxu0 0.0
      %581 = vmatpush1.msra.mxu0 0.0
      %582 = vmatprep.subr.mxu0 0.0
      %583 = vmatpush1.msra.mxu0 0.0
      %584 = vmatprep.subr.mxu0 0.0
      %585 = vmatpush1.msra.mxu0 0.0
      %586 = vmatprep.subr.mxu0 0.0
      %587 = vmatpush1.msra.mxu0 0.0
      %588 = vmatprep.subr.mxu0 0.0
      %589 = vmatpush1.msra.mxu0 0.0
      %590 = vmatprep.subr.mxu0 0.0
      %591 = vmatpush1.msra.mxu0 0.0
      %592 = vmatprep.subr.mxu0 0.0
      %593 = vmatpush1.msra.mxu0 0.0
      %594 = vmatprep.subr.mxu0 0.0
      %595 = vmatpush1.msra.mxu0 0.0
      %596 = vmatprep.subr.mxu0 0.0
      %597 = vmatpush1.msra.mxu0 0.0
      %598 = vmatprep.subr.mxu0 0.0
      %599 = vmatpush1.msra.mxu0 0.0
      %600 = vmatprep.subr.mxu0 0.0
      %601 = vmatpush1.msra.mxu0 0.0
      %602 = vmatprep.subr.mxu0 0.0
      %603 = vmatpush1.msra.mxu0 0.0
      %604 = vmatprep.subr.mxu0 0.0
      %605 = vmatpush1.msra.mxu0 0.0
      %606 = vmatprep.subr.mxu0 0.0
      %607 = vmatpush1.msra.mxu0 0.0
      %608 = vmatprep.subr.mxu0 0.0
      %609 = vmatpush1.msra.mxu0 0.0
      %610 = vmatprep.subr.mxu0 0.0
      %611 = vmatpush1.msra.mxu0 0.0
      %612 = vmatprep.subr.mxu0 0.0
      %613 = vmatpush1.msra.mxu0 0.0
      %614 = vmatprep.subr.mxu0 0.0
      %615 = vmatpush1.msra.mxu0 0.0
      %616 = vmatprep.subr.mxu0 0.0
      %617 = vmatpush1.msra.mxu0 0.0
      %618 = vmatprep.subr.mxu0 0.0
      %619 = vmatpush1.msra.mxu0 0.0
      %620 = vmatprep.subr.mxu0 0.0
      %621 = vmatpush1.msra.mxu0 0.0
      %622 = vmatprep.subr.mxu0 0.0
      %623 = vmatpush1.msra.mxu0 0.0
      %624 = vmatprep.subr.mxu0 0.0
      %625 = vmatpush1.msra.mxu0 0.0
      %626 = vmatprep.mubr.f32.mxu0 0.0
      %627 = vmatmul.mubr.f32.gmra.mrb[0].mxu0 %v560
      %v628 = vpop.f32.mrb[0].mxu0
      %v629 = vadd.f32 %v556, %v628
      %v630 = vpop.f32.mrb[0].mxu0
      %631 = vdwg.mxu0
      %v632 = vld [vmem:[%s3] sm:$0xff]
      %v633 = vld [vmem:[%s3 + $0x8] sm:$0xff]
      %v634 = vld [vmem:[%s3 + $0x10] sm:$0xff]
      %v635 = vld [vmem:[%s3 + $0x18] sm:$0xff]
      %v636 = vld [vmem:[%s4] sm:$0x1]
      %v638 = vlaneseq
      %v639 = vshrl.u32 %v638, 7
      %v640 = vsub.s32 0, %v639
      %v641 = vrot.slane %v636, %v640
      %643 = vmatprep.subr.mxu0 0.0
      %644 = vmatpush1.msra.mxu0 %v632
      %645 = vmatprep.subr.mxu0 0.0
      %646 = vmatpush1.msra.mxu0 %v633
      %647 = vmatprep.subr.mxu0 0.0
      %648 = vmatpush1.msra.mxu0 %v634
      %649 = vmatprep.subr.mxu0 0.0
      %650 = vmatpush1.msra.mxu0 %v635
      %651 = vmatprep.subr.mxu0 0.0
      %652 = vmatpush1.msra.mxu0 0.0
      %653 = vmatprep.subr.mxu0 0.0
      %654 = vmatpush1.msra.mxu0 0.0
      %655 = vmatprep.subr.mxu0 0.0
      %656 = vmatpush1.msra.mxu0 0.0
      %657 = vmatprep.subr.mxu0 0.0
      %658 = vmatpush1.msra.mxu0 0.0
      %659 = vmatprep.subr.mxu0 0.0
      %660 = vmatpush1.msra.mxu0 0.0
      %661 = vmatprep.subr.mxu0 0.0
      %662 = vmatpush1.msra.mxu0 0.0
      %663 = vmatprep.subr.mxu0 0.0
      %664 = vmatpush1.msra.mxu0 0.0
      %665 = vmatprep.subr.mxu0 0.0
      %666 = vmatpush1.msra.mxu0 0.0
      %667 = vmatprep.subr.mxu0 0.0
      %668 = vmatpush1.msra.mxu0 0.0
      %669 = vmatprep.subr.mxu0 0.0
      %670 = vmatpush1.msra.mxu0 0.0
      %671 = vmatprep.subr.mxu0 0.0
      %672 = vmatpush1.msra.mxu0 0.0
      %673 = vmatprep.subr.mxu0 0.0
      %674 = vmatpush1.msra.mxu0 0.0
      %675 = vmatprep.subr.mxu0 0.0
      %676 = vmatpush1.msra.mxu0 0.0
      %677 = vmatprep.subr.mxu0 0.0
      %678 = vmatpush1.msra.mxu0 0.0
      %679 = vmatprep.subr.mxu0 0.0
      %680 = vmatpush1.msra.mxu0 0.0
      %681 = vmatprep.subr.mxu0 0.0
      %682 = vmatpush1.msra.mxu0 0.0
      %683 = vmatprep.subr.mxu0 0.0
      %684 = vmatpush1.msra.mxu0 0.0
      %685 = vmatprep.subr.mxu0 0.0
      %686 = vmatpush1.msra.mxu0 0.0
      %687 = vmatprep.subr.mxu0 0.0
      %688 = vmatpush1.msra.mxu0 0.0
      %689 = vmatprep.subr.mxu0 0.0
      %690 = vmatpush1.msra.mxu0 0.0
      %691 = vmatprep.subr.mxu0 0.0
      %692 = vmatpush1.msra.mxu0 0.0
      %693 = vmatprep.subr.mxu0 0.0
      %694 = vmatpush1.msra.mxu0 0.0
      %695 = vmatprep.subr.mxu0 0.0
      %696 = vmatpush1.msra.mxu0 0.0
      %697 = vmatprep.subr.mxu0 0.0
      %698 = vmatpush1.msra.mxu0 0.0
      %699 = vmatprep.subr.mxu0 0.0
      %700 = vmatpush1.msra.mxu0 0.0
      %701 = vmatprep.subr.mxu0 0.0
      %702 = vmatpush1.msra.mxu0 0.0
      %703 = vmatprep.subr.mxu0 0.0
      %704 = vmatpush1.msra.mxu0 0.0
      %705 = vmatprep.subr.mxu0 0.0
      %706 = vmatpush1.msra.mxu0 0.0
      %707 = vmatprep.mubr.f32.mxu0 0.0
      %708 = vmatmul.mubr.f32.gmra.mrb[0].mxu0 %v560
      %v709 = vpop.f32.mrb[0].mxu0
      %v710 = vadd.f32 %v641, %v709
      %v711 = vpop.f32.mrb[0].mxu0
      %712 = vdwg.mxu0
      %v713 = vld [vmem:[%s5] sm:$0xff]
      %v714 = vld [vmem:[%s5 + $0x8] sm:$0xff]
      %v715 = vld [vmem:[%s5 + $0x10] sm:$0xff]
      %v716 = vld [vmem:[%s5 + $0x18] sm:$0xff]
      %v717 = vld [vmem:[%s6] sm:$0x1]
      %v719 = vlaneseq
      %v720 = vshrl.u32 %v719, 7
      %v721 = vsub.s32 0, %v720
      %v722 = vrot.slane %v717, %v721
      %724 = vmatprep.subr.mxu0 0.0
      %725 = vmatpush1.msra.mxu0 %v713
      %726 = vmatprep.subr.mxu0 0.0
      %727 = vmatpush1.msra.mxu0 %v714
      %728 = vmatprep.subr.mxu0 0.0
      %729 = vmatpush1.msra.mxu0 %v715
      %730 = vmatprep.subr.mxu0 0.0
      %731 = vmatpush1.msra.mxu0 %v716
      %732 = vmatprep.subr.mxu0 0.0
      %733 = vmatpush1.msra.mxu0 0.0
      %734 = vmatprep.subr.mxu0 0.0
      %735 = vmatpush1.msra.mxu0 0.0
      %736 = vmatprep.subr.mxu0 0.0
      %737 = vmatpush1.msra.mxu0 0.0
      %738 = vmatprep.subr.mxu0 0.0
      %739 = vmatpush1.msra.mxu0 0.0
      %740 = vmatprep.subr.mxu0 0.0
      %741 = vmatpush1.msra.mxu0 0.0
      %742 = vmatprep.subr.mxu0 0.0
      %743 = vmatpush1.msra.mxu0 0.0
      %744 = vmatprep.subr.mxu0 0.0
      %745 = vmatpush1.msra.mxu0 0.0
      %746 = vmatprep.subr.mxu0 0.0
      %747 = vmatpush1.msra.mxu0 0.0
      %748 = vmatprep.subr.mxu0 0.0
      %749 = vmatpush1.msra.mxu0 0.0
      %750 = vmatprep.subr.mxu0 0.0
      %751 = vmatpush1.msra.mxu0 0.0
      %752 = vmatprep.subr.mxu0 0.0
      %753 = vmatpush1.msra.mxu0 0.0
      %754 = vmatprep.subr.mxu0 0.0
      %755 = vmatpush1.msra.mxu0 0.0
      %756 = vmatprep.subr.mxu0 0.0
      %757 = vmatpush1.msra.mxu0 0.0
      %758 = vmatprep.subr.mxu0 0.0
      %759 = vmatpush1.msra.mxu0 0.0
      %760 = vmatprep.subr.mxu0 0.0
      %761 = vmatpush1.msra.mxu0 0.0
      %762 = vmatprep.subr.mxu0 0.0
      %763 = vmatpush1.msra.mxu0 0.0
      %764 = vmatprep.subr.mxu0 0.0
      %765 = vmatpush1.msra.mxu0 0.0
      %766 = vmatprep.subr.mxu0 0.0
      %767 = vmatpush1.msra.mxu0 0.0
      %768 = vmatprep.subr.mxu0 0.0
      %769 = vmatpush1.msra.mxu0 0.0
      %770 = vmatprep.subr.mxu0 0.0
      %771 = vmatpush1.msra.mxu0 0.0
      %772 = vmatprep.subr.mxu0 0.0
      %773 = vmatpush1.msra.mxu0 0.0
      %774 = vmatprep.subr.mxu0 0.0
      %775 = vmatpush1.msra.mxu0 0.0
      %776 = vmatprep.subr.mxu0 0.0
      %777 = vmatpush1.msra.mxu0 0.0
      %778 = vmatprep.subr.mxu0 0.0
      %779 = vmatpush1.msra.mxu0 0.0
      %780 = vmatprep.subr.mxu0 0.0
      %781 = vmatpush1.msra.mxu0 0.0
      %782 = vmatprep.subr.mxu0 0.0
      %783 = vmatpush1.msra.mxu0 0.0
      %784 = vmatprep.subr.mxu0 0.0
      %785 = vmatpush1.msra.mxu0 0.0
      %786 = vmatprep.subr.mxu0 0.0
      %787 = vmatpush1.msra.mxu0 0.0
      %788 = vmatprep.mubr.f32.mxu0 0.0
      %789 = vmatmul.mubr.f32.gmra.mrb[0].mxu0 %v560
      %v790 = vpop.f32.mrb[0].mxu0
      %v791 = vadd.f32 %v722, %v790
      %v792 = vpop.f32.mrb[0].mxu0
      %793 = vdwg.mxu0
      %vm794 = vcmask 130048
      %v796 = vsel %vm794, %v629, 0
      %v799 = vsel %vm794, %v710, 0
      %801 = vmatprep.subr.mxu0 0.0
      %802 = vmatpush1.xpose.msra.mxu0 %v799
      %803 = vmatprep.subr.mxu0 0.0
      %804 = vmatpush1.xpose.msra.mxu0 0.0
      %805 = vmatprep.subr.mxu0 0.0
      %806 = vmatpush1.xpose.msra.mxu0 0.0
      %807 = vmatprep.subr.mxu0 0.0
      %808 = vmatpush1.xpose.msra.mxu0 0.0
      %809 = vmatprep.subr.mxu0 0.0
      %810 = vmatpush1.xpose.msra.mxu0 0.0
      %811 = vmatprep.subr.mxu0 0.0
      %812 = vmatpush1.xpose.msra.mxu0 0.0
      %813 = vmatprep.subr.mxu0 0.0
      %814 = vmatpush1.xpose.msra.mxu0 0.0
      %815 = vmatprep.subr.mxu0 0.0
      %816 = vmatpush1.xpose.msra.mxu0 0.0
      %817 = vmatprep.subr.mxu0 0.0
      %818 = vmatpush1.xpose.msra.mxu0 0.0
      %819 = vmatprep.subr.mxu0 0.0
      %820 = vmatpush1.xpose.msra.mxu0 0.0
      %821 = vmatprep.subr.mxu0 0.0
      %822 = vmatpush1.xpose.msra.mxu0 0.0
      %823 = vmatprep.subr.mxu0 0.0
      %824 = vmatpush1.xpose.msra.mxu0 0.0
      %825 = vmatprep.subr.mxu0 0.0
      %826 = vmatpush1.xpose.msra.mxu0 0.0
      %827 = vmatprep.subr.mxu0 0.0
      %828 = vmatpush1.xpose.msra.mxu0 0.0
      %829 = vmatprep.subr.mxu0 0.0
      %830 = vmatpush1.xpose.msra.mxu0 0.0
      %831 = vmatprep.subr.mxu0 0.0
      %832 = vmatpush1.xpose.msra.mxu0 0.0
      %833 = vmatprep.subr.mxu0 0.0
      %834 = vmatpush1.xpose.msra.mxu0 0.0
      %835 = vmatprep.subr.mxu0 0.0
      %836 = vmatpush1.xpose.msra.mxu0 0.0
      %837 = vmatprep.subr.mxu0 0.0
      %838 = vmatpush1.xpose.msra.mxu0 0.0
      %839 = vmatprep.subr.mxu0 0.0
      %840 = vmatpush1.xpose.msra.mxu0 0.0
      %841 = vmatprep.subr.mxu0 0.0
      %842 = vmatpush1.xpose.msra.mxu0 0.0
      %843 = vmatprep.subr.mxu0 0.0
      %844 = vmatpush1.xpose.msra.mxu0 0.0
      %845 = vmatprep.subr.mxu0 0.0
      %846 = vmatpush1.xpose.msra.mxu0 0.0
      %847 = vmatprep.subr.mxu0 0.0
      %848 = vmatpush1.xpose.msra.mxu0 0.0
      %849 = vmatprep.subr.mxu0 0.0
      %850 = vmatpush1.xpose.msra.mxu0 0.0
      %851 = vmatprep.subr.mxu0 0.0
      %852 = vmatpush1.xpose.msra.mxu0 0.0
      %853 = vmatprep.subr.mxu0 0.0
      %854 = vmatpush1.xpose.msra.mxu0 0.0
      %855 = vmatprep.subr.mxu0 0.0
      %856 = vmatpush1.xpose.msra.mxu0 0.0
      %857 = vmatprep.subr.mxu0 0.0
      %858 = vmatpush1.xpose.msra.mxu0 0.0
      %859 = vmatprep.subr.mxu0 0.0
      %860 = vmatpush1.xpose.msra.mxu0 0.0
      %861 = vmatprep.subr.mxu0 0.0
      %862 = vmatpush1.xpose.msra.mxu0 0.0
      %863 = vmatprep.subr.mxu0 0.0
      %864 = vmatpush1.xpose.msra.mxu0 0.0
      %865 = vmatprep.mubr.f32.mxu0 0.0
      %866 = vmatmul.mubr.f32.gmra.mrb[0].mxu0 %v796
      %v867 = vpop.f32.mrb[0].mxu0
      %v868 = vadd.f32 0.0, %v867
      %v869 = vpop.f32.mrb[0].mxu0
      %870 = vdwg.mxu0
      %vm871 = vcmask 64512
      %v872 = vsel %vm871, %v868, -inf
      %873 = vmax.xlane.f32.xlu0 %v872
      %v874 = vpop.xlane.xlu0 %873
      %v875 = vsub.f32 %v868, %v874
      %v876 = vmul.f32 %v875, 1.442695
      %v877 = vpow.pop %v876
      %v878 = vsel %vm871, %v877, 0.0
      %879 = vadd.xlane.f32.xlu0 %v878
      %v880 = vpop.xlane.xlu0 %879
      %v882 = vsel %vm871, %v877, 0
      %884 = vmatprep.subr.mxu0 0.0
      %885 = vmatpush1.msra.mxu0 %v791
      %886 = vmatprep.subr.mxu0 0.0
      %887 = vmatpush1.msra.mxu0 0.0
      %888 = vmatprep.subr.mxu0 0.0
      %889 = vmatpush1.msra.mxu0 0.0
      %890 = vmatprep.subr.mxu0 0.0
      %891 = vmatpush1.msra.mxu0 0.0
      %892 = vmatprep.subr.mxu0 0.0
      %893 = vmatpush1.msra.mxu0 0.0
      %894 = vmatprep.subr.mxu0 0.0
      %895 = vmatpush1.msra.mxu0 0.0
      %896 = vmatprep.subr.mxu0 0.0
      %897 = vmatpush1.msra.mxu0 0.0
      %898 = vmatprep.subr.mxu0 0.0
      %899 = vmatpush1.msra.mxu0 0.0
      %900 = vmatprep.subr.mxu0 0.0
      %901 = vmatpush1.msra.mxu0 0.0
      %902 = vmatprep.subr.mxu0 0.0
      %903 = vmatpush1.msra.mxu0 0.0
      %904 = vmatprep.subr.mxu0 0.0
      %905 = vmatpush1.msra.mxu0 0.0
      %906 = vmatprep.subr.mxu0 0.0
      %907 = vmatpush1.msra.mxu0 0.0
      %908 = vmatprep.subr.mxu0 0.0
      %909 = vmatpush1.msra.mxu0 0.0
      %910 = vmatprep.subr.mxu0 0.0
      %911 = vmatpush1.msra.mxu0 0.0
      %912 = vmatprep.subr.mxu0 0.0
      %913 = vmatpush1.msra.mxu0 0.0
      %914 = vmatprep.subr.mxu0 0.0
      %915 = vmatpush1.msra.mxu0 0.0
      %916 = vmatprep.subr.mxu0 0.0
      %917 = vmatpush1.msra.mxu0 0.0
      %918 = vmatprep.subr.mxu0 0.0
      %919 = vmatpush1.msra.mxu0 0.0
      %920 = vmatprep.subr.mxu0 0.0
      %921 = vmatpush1.msra.mxu0 0.0
      %922 = vmatprep.subr.mxu0 0.0
      %923 = vmatpush1.msra.mxu0 0.0
      %924 = vmatprep.subr.mxu0 0.0
      %925 = vmatpush1.msra.mxu0 0.0
      %926 = vmatprep.subr.mxu0 0.0
      %927 = vmatpush1.msra.mxu0 0.0
      %928 = vmatprep.subr.mxu0 0.0
      %929 = vmatpush1.msra.mxu0 0.0
      %930 = vmatprep.subr.mxu0 0.0
      %931 = vmatpush1.msra.mxu0 0.0
      %932 = vmatprep.subr.mxu0 0.0
      %933 = vmatpush1.msra.mxu0 0.0
      %934 = vmatprep.subr.mxu0 0.0
      %935 = vmatpush1.msra.mxu0 0.0
      %936 = vmatprep.subr.mxu0 0.0
      %937 = vmatpush1.msra.mxu0 0.0
      %938 = vmatprep.subr.mxu0 0.0
      %939 = vmatpush1.msra.mxu0 0.0
      %940 = vmatprep.subr.mxu0 0.0
      %941 = vmatpush1.msra.mxu0 0.0
      %942 = vmatprep.subr.mxu0 0.0
      %943 = vmatpush1.msra.mxu0 0.0
      %944 = vmatprep.subr.mxu0 0.0
      %945 = vmatpush1.msra.mxu0 0.0
      %946 = vmatprep.subr.mxu0 0.0
      %947 = vmatpush1.msra.mxu0 0.0
      %948 = vmatprep.mubr.f32.mxu0 0.0
      %949 = vmatmul.mubr.f32.gmra.mrb[0].mxu0 %v882
      %v950 = vpop.f32.mrb[0].mxu0
      %v951 = vadd.f32 0.0, %v950
      %v952 = vpop.f32.mrb[0].mxu0
      %953 = vdwg.mxu0
      %v954 = vrcp.pop %v880
      %v955 = vmul.f32 %v951, %v954
      %v956 = vld [vmem:[%s7] sm:$0xff]
      %v957 = vld [vmem:[%s7 + $0x8] sm:$0xff]
      %s958 = scalar_lea.vmem %s1, 32
      %v959 = vld [vmem:[%s958] sm:$0xff]
      %v960 = vld [vmem:[%s958 + $0x8] sm:$0xff]
      %v961 = vld [vmem:[%s958 + $0x10] sm:$0xff]
      %v962 = vld [vmem:[%s958 + $0x18] sm:$0xff]
      %s963 = scalar_lea.vmem %s2, 1
      %v964 = vld [vmem:[%s963] sm:$0x1]
      %v966 = vlaneseq
      %v967 = vshrl.u32 %v966, 7
      %v968 = vsub.s32 0, %v967
      %v969 = vrot.slane %v964, %v968
      %971 = vmatprep.subr.mxu0 0.0
      %972 = vmatpush1.msra.mxu0 %v959
      %973 = vmatprep.subr.mxu0 0.0
      %974 = vmatpush1.msra.mxu0 %v960
      %975 = vmatprep.subr.mxu0 0.0
      %976 = vmatpush1.msra.mxu0 %v961
      %977 = vmatprep.subr.mxu0 0.0
      %978 = vmatpush1.msra.mxu0 %v962
      %979 = vmatprep.subr.mxu0 0.0
      %980 = vmatpush1.msra.mxu0 0.0
      %981 = vmatprep.subr.mxu0 0.0
      %982 = vmatpush1.msra.mxu0 0.0
      %983 = vmatprep.subr.mxu0 0.0
      %984 = vmatpush1.msra.mxu0 0.0
      %985 = vmatprep.subr.mxu0 0.0
      %986 = vmatpush1.msra.mxu0 0.0
      %987 = vmatprep.subr.mxu0 0.0
      %988 = vmatpush1.msra.mxu0 0.0
      %989 = vmatprep.subr.mxu0 0.0
      %990 = vmatpush1.msra.mxu0 0.0
      %991 = vmatprep.subr.mxu0 0.0
      %992 = vmatpush1.msra.mxu0 0.0
      %993 = vmatprep.subr.mxu0 0.0
      %994 = vmatpush1.msra.mxu0 0.0
      %995 = vmatprep.subr.mxu0 0.0
      %996 = vmatpush1.msra.mxu0 0.0
      %997 = vmatprep.subr.mxu0 0.0
      %998 = vmatpush1.msra.mxu0 0.0
      %999 = vmatprep.subr.mxu0 0.0
      %1000 = vmatpush1.msra.mxu0 0.0
      %1001 = vmatprep.subr.mxu0 0.0
      %1002 = vmatpush1.msra.mxu0 0.0
      %1003 = vmatprep.subr.mxu0 0.0
      %1004 = vmatpush1.msra.mxu0 0.0
      %1005 = vmatprep.subr.mxu0 0.0
      %1006 = vmatpush1.msra.mxu0 0.0
      %1007 = vmatprep.subr.mxu0 0.0
      %1008 = vmatpush1.msra.mxu0 0.0
      %1009 = vmatprep.subr.mxu0 0.0
      %1010 = vmatpush1.msra.mxu0 0.0
      %1011 = vmatprep.subr.mxu0 0.0
      %1012 = vmatpush1.msra.mxu0 0.0
      %1013 = vmatprep.subr.mxu0 0.0
      %1014 = vmatpush1.msra.mxu0 0.0
      %1015 = vmatprep.subr.mxu0 0.0
      %1016 = vmatpush1.msra.mxu0 0.0
      %1017 = vmatprep.subr.mxu0 0.0
      %1018 = vmatpush1.msra.mxu0 0.0
      %1019 = vmatprep.subr.mxu0 0.0
      %1020 = vmatpush1.msra.mxu0 0.0
      %1021 = vmatprep.subr.mxu0 0.0
      %1022 = vmatpush1.msra.mxu0 0.0
      %1023 = vmatprep.subr.mxu0 0.0
      %1024 = vmatpush1.msra.mxu0 0.0
      %1025 = vmatprep.subr.mxu0 0.0
      %1026 = vmatpush1.msra.mxu0 0.0
      %1027 = vmatprep.subr.mxu0 0.0
      %1028 = vmatpush1.msra.mxu0 0.0
      %1029 = vmatprep.subr.mxu0 0.0
      %1030 = vmatpush1.msra.mxu0 0.0
      %1031 = vmatprep.subr.mxu0 0.0
      %1032 = vmatpush1.msra.mxu0 0.0
      %1033 = vmatprep.subr.mxu0 0.0
      %1034 = vmatpush1.msra.mxu0 0.0
      %1035 = vmatprep.mubr.f32.mxu0 0.0
      %1036 = vmatmul.mubr.f32.gmra.mrb[0].mxu0 %v560
      %v1037 = vpop.f32.mrb[0].mxu0
      %v1038 = vadd.f32 %v969, %v1037
      %v1039 = vpop.f32.mrb[0].mxu0
      %1040 = vdwg.mxu0
      %s1041 = scalar_lea.vmem %s3, 32
      %v1042 = vld [vmem:[%s1041] sm:$0xff]
      %v1043 = vld [vmem:[%s1041 + $0x8] sm:$0xff]
      %v1044 = vld [vmem:[%s1041 + $0x10] sm:$0xff]
      %v1045 = vld [vmem:[%s1041 + $0x18] sm:$0xff]
      %s1046 = scalar_lea.vmem %s4, 1
      %v1047 = vld [vmem:[%s1046] sm:$0x1]
      %v1049 = vlaneseq
      %v1050 = vshrl.u32 %v1049, 7
      %v1051 = vsub.s32 0, %v1050
      %v1052 = vrot.slane %v1047, %v1051
      %1054 = vmatprep.subr.mxu0 0.0
      %1055 = vmatpush1.msra.mxu0 %v1042
      %1056 = vmatprep.subr.mxu0 0.0
      %1057 = vmatpush1.msra.mxu0 %v1043
      %1058 = vmatprep.subr.mxu0 0.0
      %1059 = vmatpush1.msra.mxu0 %v1044
      %1060 = vmatprep.subr.mxu0 0.0
      %1061 = vmatpush1.msra.mxu0 %v1045
      %1062 = vmatprep.subr.mxu0 0.0
      %1063 = vmatpush1.msra.mxu0 0.0
      %1064 = vmatprep.subr.mxu0 0.0
      %1065 = vmatpush1.msra.mxu0 0.0
      %1066 = vmatprep.subr.mxu0 0.0
      %1067 = vmatpush1.msra.mxu0 0.0
      %1068 = vmatprep.subr.mxu0 0.0
      %1069 = vmatpush1.msra.mxu0 0.0
      %1070 = vmatprep.subr.mxu0 0.0
      %1071 = vmatpush1.msra.mxu0 0.0
      %1072 = vmatprep.subr.mxu0 0.0
      %1073 = vmatpush1.msra.mxu0 0.0
      %1074 = vmatprep.subr.mxu0 0.0
      %1075 = vmatpush1.msra.mxu0 0.0
      %1076 = vmatprep.subr.mxu0 0.0
      %1077 = vmatpush1.msra.mxu0 0.0
      %1078 = vmatprep.subr.mxu0 0.0
      %1079 = vmatpush1.msra.mxu0 0.0
      %1080 = vmatprep.subr.mxu0 0.0
      %1081 = vmatpush1.msra.mxu0 0.0
      %1082 = vmatprep.subr.mxu0 0.0
      %1083 = vmatpush1.msra.mxu0 0.0
      %1084 = vmatprep.subr.mxu0 0.0
      %1085 = vmatpush1.msra.mxu0 0.0
      %1086 = vmatprep.subr.mxu0 0.0
      %1087 = vmatpush1.msra.mxu0 0.0
      %1088 = vmatprep.subr.mxu0 0.0
      %1089 = vmatpush1.msra.mxu0 0.0
      %1090 = vmatprep.subr.mxu0 0.0
      %1091 = vmatpush1.msra.mxu0 0.0
      %1092 = vmatprep.subr.mxu0 0.0
      %1093 = vmatpush1.msra.mxu0 0.0
      %1094 = vmatprep.subr.mxu0 0.0
      %1095 = vmatpush1.msra.mxu0 0.0
      %1096 = vmatprep.subr.mxu0 0.0
      %1097 = vmatpush1.msra.mxu0 0.0
      %1098 = vmatprep.subr.mxu0 0.0
      %1099 = vmatpush1.msra.mxu0 0.0
      %1100 = vmatprep.subr.mxu0 0.0
      %1101 = vmatpush1.msra.mxu0 0.0
      %1102 = vmatprep.subr.mxu0 0.0
      %1103 = vmatpush1.msra.mxu0 0.0
      %1104 = vmatprep.subr.mxu0 0.0
      %1105 = vmatpush1.msra.mxu0 0.0
      %1106 = vmatprep.subr.mxu0 0.0
      %1107 = vmatpush1.msra.mxu0 0.0
      %1108 = vmatprep.subr.mxu0 0.0
      %1109 = vmatpush1.msra.mxu0 0.0
      %1110 = vmatprep.subr.mxu0 0.0
      %1111 = vmatpush1.msra.mxu0 0.0
      %1112 = vmatprep.subr.mxu0 0.0
      %1113 = vmatpush1.msra.mxu0 0.0
      %1114 = vmatprep.subr.mxu0 0.0
      %1115 = vmatpush1.msra.mxu0 0.0
      %1116 = vmatprep.subr.mxu0 0.0
      %1117 = vmatpush1.msra.mxu0 0.0
      %1118 = vmatprep.mubr.f32.mxu0 0.0
      %1119 = vmatmul.mubr.f32.gmra.mrb[0].mxu0 %v560
      %v1120 = vpop.f32.mrb[0].mxu0
      %v1121 = vadd.f32 %v1052, %v1120
      %v1122 = vpop.f32.mrb[0].mxu0
      %1123 = vdwg.mxu0
      %s1124 = scalar_lea.vmem %s5, 32
      %v1125 = vld [vmem:[%s1124] sm:$0xff]
      %v1126 = vld [vmem:[%s1124 + $0x8] sm:$0xff]
      %v1127 = vld [vmem:[%s1124 + $0x10] sm:$0xff]
      %v1128 = vld [vmem:[%s1124 + $0x18] sm:$0xff]
      %s1129 = scalar_lea.vmem %s6, 1
      %v1130 = vld [vmem:[%s1129] sm:$0x1]
      %v1132 = vlaneseq
      %v1133 = vshrl.u32 %v1132, 7
      %v1134 = vsub.s32 0, %v1133
      %v1135 = vrot.slane %v1130, %v1134
      %1137 = vmatprep.subr.mxu0 0.0
      %1138 = vmatpush1.msra.mxu0 %v1125
      %1139 = vmatprep.subr.mxu0 0.0
      %1140 = vmatpush1.msra.mxu0 %v1126
      %1141 = vmatprep.subr.mxu0 0.0
      %1142 = vmatpush1.msra.mxu0 %v1127
      %1143 = vmatprep.subr.mxu0 0.0
      %1144 = vmatpush1.msra.mxu0 %v1128
      %1145 = vmatprep.subr.mxu0 0.0
      %1146 = vmatpush1.msra.mxu0 0.0
      %1147 = vmatprep.subr.mxu0 0.0
      %1148 = vmatpush1.msra.mxu0 0.0
      %1149 = vmatprep.subr.mxu0 0.0
      %1150 = vmatpush1.msra.mxu0 0.0
      %1151 = vmatprep.subr.mxu0 0.0
      %1152 = vmatpush1.msra.mxu0 0.0
      %1153 = vmatprep.subr.mxu0 0.0
      %1154 = vmatpush1.msra.mxu0 0.0
      %1155 = vmatprep.subr.mxu0 0.0
      %1156 = vmatpush1.msra.mxu0 0.0
      %1157 = vmatprep.subr.mxu0 0.0
      %1158 = vmatpush1.msra.mxu0 0.0
      %1159 = vmatprep.subr.mxu0 0.0
      %1160 = vmatpush1.msra.mxu0 0.0
      %1161 = vmatprep.subr.mxu0 0.0
      %1162 = vmatpush1.msra.mxu0 0.0
      %1163 = vmatprep.subr.mxu0 0.0
      %1164 = vmatpush1.msra.mxu0 0.0
      %1165 = vmatprep.subr.mxu0 0.0
      %1166 = vmatpush1.msra.mxu0 0.0
      %1167 = vmatprep.subr.mxu0 0.0
      %1168 = vmatpush1.msra.mxu0 0.0
      %1169 = vmatprep.subr.mxu0 0.0
      %1170 = vmatpush1.msra.mxu0 0.0
      %1171 = vmatprep.subr.mxu0 0.0
      %1172 = vmatpush1.msra.mxu0 0.0
      %1173 = vmatprep.subr.mxu0 0.0
      %1174 = vmatpush1.msra.mxu0 0.0
      %1175 = vmatprep.subr.mxu0 0.0
      %1176 = vmatpush1.msra.mxu0 0.0
      %1177 = vmatprep.subr.mxu0 0.0
      %1178 = vmatpush1.msra.mxu0 0.0
      %1179 = vmatprep.subr.mxu0 0.0
      %1180 = vmatpush1.msra.mxu0 0.0
      %1181 = vmatprep.subr.mxu0 0.0
      %1182 = vmatpush1.msra.mxu0 0.0
      %1183 = vmatprep.subr.mxu0 0.0
      %1184 = vmatpush1.msra.mxu0 0.0
      %1185 = vmatprep.subr.mxu0 0.0
      %1186 = vmatpush1.msra.mxu0 0.0
      %1187 = vmatprep.subr.mxu0 0.0
      %1188 = vmatpush1.msra.mxu0 0.0
      %1189 = vmatprep.subr.mxu0 0.0
      %1190 = vmatpush1.msra.mxu0 0.0
      %1191 = vmatprep.subr.mxu0 0.0
      %1192 = vmatpush1.msra.mxu0 0.0
      %1193 = vmatprep.subr.mxu0 0.0
      %1194 = vmatpush1.msra.mxu0 0.0
      %1195 = vmatprep.subr.mxu0 0.0
      %1196 = vmatpush1.msra.mxu0 0.0
      %1197 = vmatprep.subr.mxu0 0.0
      %1198 = vmatpush1.msra.mxu0 0.0
      %1199 = vmatprep.subr.mxu0 0.0
      %1200 = vmatpush1.msra.mxu0 0.0
      %1201 = vmatprep.mubr.f32.mxu0 0.0
      %1202 = vmatmul.mubr.f32.gmra.mrb[0].mxu0 %v560
      %v1203 = vpop.f32.mrb[0].mxu0
      %v1204 = vadd.f32 %v1135, %v1203
      %v1205 = vpop.f32.mrb[0].mxu0
      %1206 = vdwg.mxu0
      %v1208 = vsel %vm794, %v1038, 0
      %v1211 = vsel %vm794, %v1121, 0
      %1213 = vmatprep.subr.mxu0 0.0
      %1214 = vmatpush1.xpose.msra.mxu0 %v1211
      %1215 = vmatprep.subr.mxu0 0.0
      %1216 = vmatpush1.xpose.msra.mxu0 0.0
      %1217 = vmatprep.subr.mxu0 0.0
      %1218 = vmatpush1.xpose.msra.mxu0 0.0
      %1219 = vmatprep.subr.mxu0 0.0
      %1220 = vmatpush1.xpose.msra.mxu0 0.0
      %1221 = vmatprep.subr.mxu0 0.0
      %1222 = vmatpush1.xpose.msra.mxu0 0.0
      %1223 = vmatprep.subr.mxu0 0.0
      %1224 = vmatpush1.xpose.msra.mxu0 0.0
      %1225 = vmatprep.subr.mxu0 0.0
      %1226 = vmatpush1.xpose.msra.mxu0 0.0
      %1227 = vmatprep.subr.mxu0 0.0
      %1228 = vmatpush1.xpose.msra.mxu0 0.0
      %1229 = vmatprep.subr.mxu0 0.0
      %1230 = vmatpush1.xpose.msra.mxu0 0.0
      %1231 = vmatprep.subr.mxu0 0.0
      %1232 = vmatpush1.xpose.msra.mxu0 0.0
      %1233 = vmatprep.subr.mxu0 0.0
      %1234 = vmatpush1.xpose.msra.mxu0 0.0
      %1235 = vmatprep.subr.mxu0 0.0
      %1236 = vmatpush1.xpose.msra.mxu0 0.0
      %1237 = vmatprep.subr.mxu0 0.0
      %1238 = vmatpush1.xpose.msra.mxu0 0.0
      %1239 = vmatprep.subr.mxu0 0.0
      %1240 = vmatpush1.xpose.msra.mxu0 0.0
      %1241 = vmatprep.subr.mxu0 0.0
      %1242 = vmatpush1.xpose.msra.mxu0 0.0
      %1243 = vmatprep.subr.mxu0 0.0
      %1244 = vmatpush1.xpose.msra.mxu0 0.0
      %1245 = vmatprep.subr.mxu0 0.0
      %1246 = vmatpush1.xpose.msra.mxu0 0.0
      %1247 = vmatprep.subr.mxu0 0.0
      %1248 = vmatpush1.xpose.msra.mxu0 0.0
      %1249 = vmatprep.subr.mxu0 0.0
      %1250 = vmatpush1.xpose.msra.mxu0 0.0
      %1251 = vmatprep.subr.mxu0 0.0
      %1252 = vmatpush1.xpose.msra.mxu0 0.0
      %1253 = vmatprep.subr.mxu0 0.0
      %1254 = vmatpush1.xpose.msra.mxu0 0.0
      %1255 = vmatprep.subr.mxu0 0.0
      %1256 = vmatpush1.xpose.msra.mxu0 0.0
      %1257 = vmatprep.subr.mxu0 0.0
      %1258 = vmatpush1.xpose.msra.mxu0 0.0
      %1259 = vmatprep.subr.mxu0 0.0
      %1260 = vmatpush1.xpose.msra.mxu0 0.0
      %1261 = vmatprep.subr.mxu0 0.0
      %1262 = vmatpush1.xpose.msra.mxu0 0.0
      %1263 = vmatprep.subr.mxu0 0.0
      %1264 = vmatpush1.xpose.msra.mxu0 0.0
      %1265 = vmatprep.subr.mxu0 0.0
      %1266 = vmatpush1.xpose.msra.mxu0 0.0
      %1267 = vmatprep.subr.mxu0 0.0
      %1268 = vmatpush1.xpose.msra.mxu0 0.0
      %1269 = vmatprep.subr.mxu0 0.0
      %1270 = vmatpush1.xpose.msra.mxu0 0.0
      %1271 = vmatprep.subr.mxu0 0.0
      %1272 = vmatpush1.xpose.msra.mxu0 0.0
      %1273 = vmatprep.subr.mxu0 0.0
      %1274 = vmatpush1.xpose.msra.mxu0 0.0
      %1275 = vmatprep.subr.mxu0 0.0
      %1276 = vmatpush1.xpose.msra.mxu0 0.0
      %1277 = vmatprep.mubr.f32.mxu0 0.0
      %1278 = vmatmul.mubr.f32.gmra.mrb[0].mxu0 %v1208
      %v1279 = vpop.f32.mrb[0].mxu0
      %v1280 = vadd.f32 0.0, %v1279
      %v1281 = vpop.f32.mrb[0].mxu0
      %1282 = vdwg.mxu0
      %v1283 = vsel %vm871, %v1280, -inf
      %1284 = vmax.xlane.f32.xlu0 %v1283
      %v1285 = vpop.xlane.xlu0 %1284
      %v1286 = vsub.f32 %v1280, %v1285
      %v1287 = vmul.f32 %v1286, 1.442695
      %v1288 = vpow.pop %v1287
      %v1289 = vsel %vm871, %v1288, 0.0
      %1290 = vadd.xlane.f32.xlu0 %v1289
      %v1291 = vpop.xlane.xlu0 %1290
      %v1293 = vsel %vm871, %v1288, 0
      %1295 = vmatprep.subr.mxu0 0.0
      %1296 = vmatpush1.msra.mxu0 %v1204
      %1297 = vmatprep.subr.mxu0 0.0
      %1298 = vmatpush1.msra.mxu0 0.0
      %1299 = vmatprep.subr.mxu0 0.0
      %1300 = vmatpush1.msra.mxu0 0.0
      %1301 = vmatprep.subr.mxu0 0.0
      %1302 = vmatpush1.msra.mxu0 0.0
      %1303 = vmatprep.subr.mxu0 0.0
      %1304 = vmatpush1.msra.mxu0 0.0
      %1305 = vmatprep.subr.mxu0 0.0
      %1306 = vmatpush1.msra.mxu0 0.0
      %1307 = vmatprep.subr.mxu0 0.0
      %1308 = vmatpush1.msra.mxu0 0.0
      %1309 = vmatprep.subr.mxu0 0.0
      %1310 = vmatpush1.msra.mxu0 0.0
      %1311 = vmatprep.subr.mxu0 0.0
      %1312 = vmatpush1.msra.mxu0 0.0
      %1313 = vmatprep.subr.mxu0 0.0
      %1314 = vmatpush1.msra.mxu0 0.0
      %1315 = vmatprep.subr.mxu0 0.0
      %1316 = vmatpush1.msra.mxu0 0.0
      %1317 = vmatprep.subr.mxu0 0.0
      %1318 = vmatpush1.msra.mxu0 0.0
      %1319 = vmatprep.subr.mxu0 0.0
      %1320 = vmatpush1.msra.mxu0 0.0
      %1321 = vmatprep.subr.mxu0 0.0
      %1322 = vmatpush1.msra.mxu0 0.0
      %1323 = vmatprep.subr.mxu0 0.0
      %1324 = vmatpush1.msra.mxu0 0.0
      %1325 = vmatprep.subr.mxu0 0.0
      %1326 = vmatpush1.msra.mxu0 0.0
      %1327 = vmatprep.subr.mxu0 0.0
      %1328 = vmatpush1.msra.mxu0 0.0
      %1329 = vmatprep.subr.mxu0 0.0
      %1330 = vmatpush1.msra.mxu0 0.0
      %1331 = vmatprep.subr.mxu0 0.0
      %1332 = vmatpush1.msra.mxu0 0.0
      %1333 = vmatprep.subr.mxu0 0.0
      %1334 = vmatpush1.msra.mxu0 0.0
      %1335 = vmatprep.subr.mxu0 0.0
      %1336 = vmatpush1.msra.mxu0 0.0
      %1337 = vmatprep.subr.mxu0 0.0
      %1338 = vmatpush1.msra.mxu0 0.0
      %1339 = vmatprep.subr.mxu0 0.0
      %1340 = vmatpush1.msra.mxu0 0.0
      %1341 = vmatprep.subr.mxu0 0.0
      %1342 = vmatpush1.msra.mxu0 0.0
      %1343 = vmatprep.subr.mxu0 0.0
      %1344 = vmatpush1.msra.mxu0 0.0
      %1345 = vmatprep.subr.mxu0 0.0
      %1346 = vmatpush1.msra.mxu0 0.0
      %1347 = vmatprep.subr.mxu0 0.0
      %1348 = vmatpush1.msra.mxu0 0.0
      %1349 = vmatprep.subr.mxu0 0.0
      %1350 = vmatpush1.msra.mxu0 0.0
      %1351 = vmatprep.subr.mxu0 0.0
      %1352 = vmatpush1.msra.mxu0 0.0
      %1353 = vmatprep.subr.mxu0 0.0
      %1354 = vmatpush1.msra.mxu0 0.0
      %1355 = vmatprep.subr.mxu0 0.0
      %1356 = vmatpush1.msra.mxu0 0.0
      %1357 = vmatprep.subr.mxu0 0.0
      %1358 = vmatpush1.msra.mxu0 0.0
      %1359 = vmatprep.mubr.f32.mxu0 0.0
      %1360 = vmatmul.mubr.f32.gmra.mrb[0].mxu0 %v1293
      %v1361 = vpop.f32.mrb[0].mxu0
      %v1362 = vadd.f32 0.0, %v1361
      %v1363 = vpop.f32.mrb[0].mxu0
      %1364 = vdwg.mxu0
      %v1365 = vrcp.pop %v1291
      %v1366 = vmul.f32 %v1362, %v1365
      %s1367 = scalar_lea.vmem %s7, 16
      %v1368 = vld [vmem:[%s1367] sm:$0xff]
      %v1369 = vld [vmem:[%s1367 + $0x8] sm:$0xff]
      %v1371 = vsel %vm794, %v1366, 0
      %1373 = vmatprep.subr.mxu0 0.0
      %1374 = vmatpush1.msra.mxu0 %v1368
      %1375 = vmatprep.subr.mxu0 0.0
      %1376 = vmatpush1.msra.mxu0 %v1369
      %1377 = vmatprep.subr.mxu0 0.0
      %1378 = vmatpush1.msra.mxu0 0.0
      %1379 = vmatprep.subr.mxu0 0.0
      %1380 = vmatpush1.msra.mxu0 0.0
      %1381 = vmatprep.subr.mxu0 0.0
      %1382 = vmatpush1.msra.mxu0 0.0
      %1383 = vmatprep.subr.mxu0 0.0
      %1384 = vmatpush1.msra.mxu0 0.0
      %1385 = vmatprep.subr.mxu0 0.0
      %1386 = vmatpush1.msra.mxu0 0.0
      %1387 = vmatprep.subr.mxu0 0.0
      %1388 = vmatpush1.msra.mxu0 0.0
      %1389 = vmatprep.subr.mxu0 0.0
      %1390 = vmatpush1.msra.mxu0 0.0
      %1391 = vmatprep.subr.mxu0 0.0
      %1392 = vmatpush1.msra.mxu0 0.0
      %1393 = vmatprep.subr.mxu0 0.0
      %1394 = vmatpush1.msra.mxu0 0.0
      %1395 = vmatprep.subr.mxu0 0.0
      %1396 = vmatpush1.msra.mxu0 0.0
      %1397 = vmatprep.subr.mxu0 0.0
      %1398 = vmatpush1.msra.mxu0 0.0
      %1399 = vmatprep.subr.mxu0 0.0
      %1400 = vmatpush1.msra.mxu0 0.0
      %1401 = vmatprep.subr.mxu0 0.0
      %1402 = vmatpush1.msra.mxu0 0.0
      %1403 = vmatprep.subr.mxu0 0.0
      %1404 = vmatpush1.msra.mxu0 0.0
      %1405 = vmatprep.subr.mxu0 0.0
      %1406 = vmatpush1.msra.mxu0 0.0
      %1407 = vmatprep.subr.mxu0 0.0
      %1408 = vmatpush1.msra.mxu0 0.0
      %1409 = vmatprep.subr.mxu0 0.0
      %1410 = vmatpush1.msra.mxu0 0.0
      %1411 = vmatprep.subr.mxu0 0.0
      %1412 = vmatpush1.msra.mxu0 0.0
      %1413 = vmatprep.subr.mxu0 0.0
      %1414 = vmatpush1.msra.mxu0 0.0
      %1415 = vmatprep.subr.mxu0 0.0
      %1416 = vmatpush1.msra.mxu0 0.0
      %1417 = vmatprep.subr.mxu0 0.0
      %1418 = vmatpush1.msra.mxu0 0.0
      %1419 = vmatprep.subr.mxu0 0.0
      %1420 = vmatpush1.msra.mxu0 0.0
      %1421 = vmatprep.subr.mxu0 0.0
      %1422 = vmatpush1.msra.mxu0 0.0
      %1423 = vmatprep.subr.mxu0 0.0
      %1424 = vmatpush1.msra.mxu0 0.0
      %1425 = vmatprep.subr.mxu0 0.0
      %1426 = vmatpush1.msra.mxu0 0.0
      %1427 = vmatprep.subr.mxu0 0.0
      %1428 = vmatpush1.msra.mxu0 0.0
      %1429 = vmatprep.subr.mxu0 0.0
      %1430 = vmatpush1.msra.mxu0 0.0
      %1431 = vmatprep.subr.mxu0 0.0
      %1432 = vmatpush1.msra.mxu0 0.0
      %1433 = vmatprep.subr.mxu0 0.0
      %1434 = vmatpush1.msra.mxu0 0.0
      %1435 = vmatprep.subr.mxu0 0.0
      %1436 = vmatpush1.msra.mxu0 0.0
      %1437 = vmatprep.mubr.f32.mxu0 0.0
      %1438 = vmatmul.mubr.f32.gmra.mrb[0].mxu0 %v1371
      %v1439 = vpop.f32.mrb[0].mxu0
      %v1440 = vadd.f32 0.0, %v1439
      %v1441 = vpop.f32.mrb[0].mxu0
      %1442 = vdwg.mxu0
      %v1444 = vsel %vm794, %v955, 0
      %1446 = vmatprep.subr.mxu0 0.0
      %1447 = vmatpush1.msra.mxu0 %v956
      %1448 = vmatprep.subr.mxu0 0.0
      %1449 = vmatpush1.msra.mxu0 %v957
      %1450 = vmatprep.subr.mxu0 0.0
      %1451 = vmatpush1.msra.mxu0 0.0
      %1452 = vmatprep.subr.mxu0 0.0
      %1453 = vmatpush1.msra.mxu0 0.0
      %1454 = vmatprep.subr.mxu0 0.0
      %1455 = vmatpush1.msra.mxu0 0.0
      %1456 = vmatprep.subr.mxu0 0.0
      %1457 = vmatpush1.msra.mxu0 0.0
      %1458 = vmatprep.subr.mxu0 0.0
      %1459 = vmatpush1.msra.mxu0 0.0
      %1460 = vmatprep.subr.mxu0 0.0
      %1461 = vmatpush1.msra.mxu0 0.0
      %1462 = vmatprep.subr.mxu0 0.0
      %1463 = vmatpush1.msra.mxu0 0.0
      %1464 = vmatprep.subr.mxu0 0.0
      %1465 = vmatpush1.msra.mxu0 0.0
      %1466 = vmatprep.subr.mxu0 0.0
      %1467 = vmatpush1.msra.mxu0 0.0
      %1468 = vmatprep.subr.mxu0 0.0
      %1469 = vmatpush1.msra.mxu0 0.0
      %1470 = vmatprep.subr.mxu0 0.0
      %1471 = vmatpush1.msra.mxu0 0.0
      %1472 = vmatprep.subr.mxu0 0.0
      %1473 = vmatpush1.msra.mxu0 0.0
      %1474 = vmatprep.subr.mxu0 0.0
      %1475 = vmatpush1.msra.mxu0 0.0
      %1476 = vmatprep.subr.mxu0 0.0
      %1477 = vmatpush1.msra.mxu0 0.0
      %1478 = vmatprep.subr.mxu0 0.0
      %1479 = vmatpush1.msra.mxu0 0.0
      %1480 = vmatprep.subr.mxu0 0.0
      %1481 = vmatpush1.msra.mxu0 0.0
      %1482 = vmatprep.subr.mxu0 0.0
      %1483 = vmatpush1.msra.mxu0 0.0
      %1484 = vmatprep.subr.mxu0 0.0
      %1485 = vmatpush1.msra.mxu0 0.0
      %1486 = vmatprep.subr.mxu0 0.0
      %1487 = vmatpush1.msra.mxu0 0.0
      %1488 = vmatprep.subr.mxu0 0.0
      %1489 = vmatpush1.msra.mxu0 0.0
      %1490 = vmatprep.subr.mxu0 0.0
      %1491 = vmatpush1.msra.mxu0 0.0
      %1492 = vmatprep.subr.mxu0 0.0
      %1493 = vmatpush1.msra.mxu0 0.0
      %1494 = vmatprep.subr.mxu0 0.0
      %1495 = vmatpush1.msra.mxu0 0.0
      %1496 = vmatprep.subr.mxu0 0.0
      %1497 = vmatpush1.msra.mxu0 0.0
      %1498 = vmatprep.subr.mxu0 0.0
      %1499 = vmatpush1.msra.mxu0 0.0
      %1500 = vmatprep.subr.mxu0 0.0
      %1501 = vmatpush1.msra.mxu0 0.0
      %1502 = vmatprep.subr.mxu0 0.0
      %1503 = vmatpush1.msra.mxu0 0.0
      %1504 = vmatprep.subr.mxu0 0.0
      %1505 = vmatpush1.msra.mxu0 0.0
      %1506 = vmatprep.subr.mxu0 0.0
      %1507 = vmatpush1.msra.mxu0 0.0
      %1508 = vmatprep.subr.mxu0 0.0
      %1509 = vmatpush1.msra.mxu0 0.0
      %1510 = vmatprep.mubr.f32.mxu0 0.0
      %1511 = vmatmul.mubr.f32.gmra.mrb[0].mxu0 %v1444
      %v1512 = vpop.f32.mrb[0].mxu0
      %v1513 = vadd.f32 %v1440, %v1512
      %v1514 = vpop.f32.mrb[0].mxu0
      %1515 = vdwg.mxu0
      %v1516 = vld [vmem:[%s8] sm:$0x1]
      %v1518 = vlaneseq
      %v1519 = vshrl.u32 %v1518, 7
      %v1520 = vsub.s32 0, %v1519
      %v1521 = vrot.slane %v1516, %v1520
      %v1523 = vadd.f32 %v1513, %v1521
      %v1524 = vld [vmem:[%s9] sm:$0x1]
      %v1525 = vld [vmem:[%s10] sm:$0x1]
      %v1526 = vadd.f32 %v546, %v1523
      %v1527 = vsel %vm558, %v1526, 0.0
      %1528 = vadd.xlane.f32.xlu0 %v1527
      %v1529 = vpop.xlane.xlu0 %1528
      %v1530 = vrcp.pop 32.0
      %v1531 = vmul.f32 %v1529, %v1530
      %v1532 = vsub.f32 %v1526, %v1531
      %v1533 = vmul.f32 %v1532, %v1532
      %v1534 = vsel %vm558, %v1533, 0.0
      %1535 = vadd.xlane.f32.xlu0 %v1534
      %v1536 = vpop.xlane.xlu0 %1535
      %v1537 = vmul.f32 %v1536, %v1530
      %v1538 = vadd.f32 %v1537, 1e-05
      %v1539 = vrsqrt.pop %v1538
      %v1540 = vmul.f32 %v1532, %v1539
      %v1542 = vlaneseq
      %v1543 = vshrl.u32 %v1542, 7
      %v1544 = vsub.s32 0, %v1543
      %v1545 = vrot.slane %v1524, %v1544
      %v1547 = vmul.f32 %v1540, %v1545
      %v1549 = vlaneseq
      %v1550 = vshrl.u32 %v1549, 7
      %v1551 = vsub.s32 0, %v1550
      %v1552 = vrot.slane %v1525, %v1551
      %v1554 = vadd.f32 %v1547, %v1552
      %v1555 = vld [vmem:[%s11] sm:$0xff]
      %v1556 = vld [vmem:[%s11 + $0x8] sm:$0xff]
      %v1557 = vld [vmem:[%s11 + $0x10] sm:$0xff]
      %v1558 = vld [vmem:[%s11 + $0x18] sm:$0xff]
      %v1559 = vld [vmem:[%s12] sm:$0x1]
      %v1561 = vlaneseq
      %v1562 = vshrl.u32 %v1561, 7
      %v1563 = vsub.s32 0, %v1562
      %v1564 = vrot.slane %v1559, %v1563
      %v1567 = vsel %vm558, %v1554, 0
      %1569 = vmatprep.subr.mxu0 0.0
      %1570 = vmatpush1.msra.mxu0 %v1555
      %1571 = vmatprep.subr.mxu0 0.0
      %1572 = vmatpush1.msra.mxu0 %v1556
      %1573 = vmatprep.subr.mxu0 0.0
      %1574 = vmatpush1.msra.mxu0 %v1557
      %1575 = vmatprep.subr.mxu0 0.0
      %1576 = vmatpush1.msra.mxu0 %v1558
      %1577 = vmatprep.subr.mxu0 0.0
      %1578 = vmatpush1.msra.mxu0 0.0
      %1579 = vmatprep.subr.mxu0 0.0
      %1580 = vmatpush1.msra.mxu0 0.0
      %1581 = vmatprep.subr.mxu0 0.0
      %1582 = vmatpush1.msra.mxu0 0.0
      %1583 = vmatprep.subr.mxu0 0.0
      %1584 = vmatpush1.msra.mxu0 0.0
      %1585 = vmatprep.subr.mxu0 0.0
      %1586 = vmatpush1.msra.mxu0 0.0
      %1587 = vmatprep.subr.mxu0 0.0
      %1588 = vmatpush1.msra.mxu0 0.0
      %1589 = vmatprep.subr.mxu0 0.0
      %1590 = vmatpush1.msra.mxu0 0.0
      %1591 = vmatprep.subr.mxu0 0.0
      %1592 = vmatpush1.msra.mxu0 0.0
      %1593 = vmatprep.subr.mxu0 0.0
      %1594 = vmatpush1.msra.mxu0 0.0
      %1595 = vmatprep.subr.mxu0 0.0
      %1596 = vmatpush1.msra.mxu0 0.0
      %1597 = vmatprep.subr.mxu0 0.0
      %1598 = vmatpush1.msra.mxu0 0.0
      %1599 = vmatprep.subr.mxu0 0.0
      %1600 = vmatpush1.msra.mxu0 0.0
      %1601 = vmatprep.subr.mxu0 0.0
      %1602 = vmatpush1.msra.mxu0 0.0
      %1603 = vmatprep.subr.mxu0 0.0
      %1604 = vmatpush1.msra.mxu0 0.0
      %1605 = vmatprep.subr.mxu0 0.0
      %1606 = vmatpush1.msra.mxu0 0.0
      %1607 = vmatprep.subr.mxu0 0.0
      %1608 = vmatpush1.msra.mxu0 0.0
      %1609 = vmatprep.subr.mxu0 0.0
      %1610 = vmatpush1.msra.mxu0 0.0
      %1611 = vmatprep.subr.mxu0 0.0
      %1612 = vmatpush1.msra.mxu0 0.0
      %1613 = vmatprep.subr.mxu0 0.0
      %1614 = vmatpush1.msra.mxu0 0.0
      %1615 = vmatprep.subr.mxu0 0.0
      %1616 = vmatpush1.msra.mxu0 0.0
      %1617 = vmatprep.subr.mxu0 0.0
      %1618 = vmatpush1.msra.mxu0 0.0
      %1619 = vmatprep.subr.mxu0 0.0
      %1620 = vmatpush1.msra.mxu0 0.0
      %1621 = vmatprep.subr.mxu0 0.0
      %1622 = vmatpush1.msra.mxu0 0.0
      %1623 = vmatprep.subr.mxu0 0.0
      %1624 = vmatpush1.msra.mxu0 0.0
      %1625 = vmatprep.subr.mxu0 0.0
      %1626 = vmatpush1.msra.mxu0 0.0
      %1627 = vmatprep.subr.mxu0 0.0
      %1628 = vmatpush1.msra.mxu0 0.0
      %1629 = vmatprep.subr.mxu0 0.0
      %1630 = vmatpush1.msra.mxu0 0.0
      %1631 = vmatprep.subr.mxu0 0.0
      %1632 = vmatpush1.msra.mxu0 0.0
      %1633 = vmatprep.mubr.f32.mxu0 0.0
      %1634 = vmatmul.mubr.f32.gmra.mrb[0].mxu0 %v1567
      %v1635 = vpop.f32.mrb[0].mxu0
      %v1636 = vadd.f32 %v1564, %v1635
      %v1637 = vpop.f32.mrb[0].mxu0
      %1638 = vdwg.mxu0
      %v1639 = vmax.f32 %v1636, 0.0
      %v1640 = vld [vmem:[%s13] sm:$0xff]
      %v1641 = vld [vmem:[%s13 + $0x8] sm:$0xff]
      %v1642 = vld [vmem:[%s13 + $0x10] sm:$0xff]
      %v1643 = vld [vmem:[%s13 + $0x18] sm:$0xff]
      %v1644 = vld [vmem:[%s13 + $0x20] sm:$0xff]
      %v1645 = vld [vmem:[%s13 + $0x28] sm:$0xff]
      %v1646 = vld [vmem:[%s13 + $0x30] sm:$0xff]
      %v1647 = vld [vmem:[%s13 + $0x38] sm:$0xff]
      %v1648 = vld [vmem:[%s14] sm:$0x1]
      %v1650 = vlaneseq
      %v1651 = vshrl.u32 %v1650, 7
      %v1652 = vsub.s32 0, %v1651
      %v1653 = vrot.slane %v1648, %v1652
      %vm1655 = vcmask 523264
      %v1657 = vsel %vm1655, %v1639, 0
      %1659 = vmatprep.subr.mxu0 0.0
      %1660 = vmatpush1.msra.mxu0 %v1640
      %1661 = vmatprep.subr.mxu0 0.0
      %1662 = vmatpush1.msra.mxu0 %v1641
      %1663 = vmatprep.subr.mxu0 0.0
      %1664 = vmatpush1.msra.mxu0 %v1642
      %1665 = vmatprep.subr.mxu0 0.0
      %1666 = vmatpush1.msra.mxu0 %v1643
      %1667 = vmatprep.subr.mxu0 0.0
      %1668 = vmatpush1.msra.mxu0 %v1644
      %1669 = vmatprep.subr.mxu0 0.0
      %1670 = vmatpush1.msra.mxu0 %v1645
      %1671 = vmatprep.subr.mxu0 0.0
      %1672 = vmatpush1.msra.mxu0 %v1646
      %1673 = vmatprep.subr.mxu0 0.0
      %1674 = vmatpush1.msra.mxu0 %v1647
      %1675 = vmatprep.subr.mxu0 0.0
      %1676 = vmatpush1.msra.mxu0 0.0
      %1677 = vmatprep.subr.mxu0 0.0
      %1678 = vmatpush1.msra.mxu0 0.0
      %1679 = vmatprep.subr.mxu0 0.0
      %1680 = vmatpush1.msra.mxu0 0.0
      %1681 = vmatprep.subr.mxu0 0.0
      %1682 = vmatpush1.msra.mxu0 0.0
      %1683 = vmatprep.subr.mxu0 0.0
      %1684 = vmatpush1.msra.mxu0 0.0
      %1685 = vmatprep.subr.mxu0 0.0
      %1686 = vmatpush1.msra.mxu0 0.0
      %1687 = vmatprep.subr.mxu0 0.0
      %1688 = vmatpush1.msra.mxu0 0.0
      %1689 = vmatprep.subr.mxu0 0.0
      %1690 = vmatpush1.msra.mxu0 0.0
      %1691 = vmatprep.subr.mxu0 0.0
      %1692 = vmatpush1.msra.mxu0 0.0
      %1693 = vmatprep.subr.mxu0 0.0
      %1694 = vmatpush1.msra.mxu0 0.0
      %1695 = vmatprep.subr.mxu0 0.0
      %1696 = vmatpush1.msra.mxu0 0.0
      %1697 = vmatprep.subr.mxu0 0.0
      %1698 = vmatpush1.msra.mxu0 0.0
      %1699 = vmatprep.subr.mxu0 0.0
      %1700 = vmatpush1.msra.mxu0 0.0
      %1701 = vmatprep.subr.mxu0 0.0
      %1702 = vmatpush1.msra.mxu0 0.0
      %1703 = vmatprep.subr.mxu0 0.0
      %1704 = vmatpush1.msra.mxu0 0.0
      %1705 = vmatprep.subr.mxu0 0.0
      %1706 = vmatpush1.msra.mxu0 0.0
      %1707 = vmatprep.subr.mxu0 0.0
      %1708 = vmatpush1.msra.mxu0 0.0
      %1709 = vmatprep.subr.mxu0 0.0
      %1710 = vmatpush1.msra.mxu0 0.0
      %1711 = vmatprep.subr.mxu0 0.0
      %1712 = vmatpush1.msra.mxu0 0.0
      %1713 = vmatprep.subr.mxu0 0.0
      %1714 = vmatpush1.msra.mxu0 0.0
      %1715 = vmatprep.subr.mxu0 0.0
      %1716 = vmatpush1.msra.mxu0 0.0
      %1717 = vmatprep.subr.mxu0 0.0
      %1718 = vmatpush1.msra.mxu0 0.0
      %1719 = vmatprep.subr.mxu0 0.0
      %1720 = vmatpush1.msra.mxu0 0.0
      %1721 = vmatprep.subr.mxu0 0.0
      %1722 = vmatpush1.msra.mxu0 0.0
      %1723 = vmatprep.mubr.f32.mxu0 0.0
      %1724 = vmatmul.mubr.f32.gmra.mrb[0].mxu0 %v1657
      %v1725 = vpop.f32.mrb[0].mxu0
      %v1726 = vadd.f32 %v1653, %v1725
      %v1727 = vpop.f32.mrb[0].mxu0
      %1728 = vdwg.mxu0
      %v1729 = vadd.f32 %v1554, %v1726
      %v1730 = vsel %vm558, %v1729, 0.0
      %1731 = vadd.xlane.f32.xlu0 %v1730
      %v1732 = vpop.xlane.xlu0 %1731
      %v1733 = vmul.f32 %v1732, %v1530
      %v1734 = vsub.f32 %v1729, %v1733
      %v1735 = vmul.f32 %v1734, %v1734
      %v1736 = vsel %vm558, %v1735, 0.0
      %1737 = vadd.xlane.f32.xlu0 %v1736
      %v1738 = vpop.xlane.xlu0 %1737
      %v1739 = vmul.f32 %v1738, %v1530
      %v1740 = vadd.f32 %v1739, 1e-05
      %v1741 = vrsqrt.pop %v1740
      %v1742 = vmul.f32 %v1734, %v1741
      %v1743 = vmul.f32 %v1742, %v1545
      %v1744 = vadd.f32 %v1743, %v1552
      %v1745 = vld [vmem:[%s15] sm:$0xff]
      %v1746 = vld [vmem:[%s15 + $0x8] sm:$0xff]
      %v1747 = vld [vmem:[%s15 + $0x10] sm:$0xff]
      %v1748 = vld [vmem:[%s15 + $0x18] sm:$0xff]
      %v1749 = vld [vmem:[#allocation2] sm:$0x1]
      %v1751 = vsel %vm558, %v1744, 0
      %1753 = vmatprep.subr.mxu0 0.0
      %1754 = vmatpush1.msra.mxu0 %v1745
      %1755 = vmatprep.subr.mxu0 0.0
      %1756 = vmatpush1.msra.mxu0 %v1746
      %1757 = vmatprep.subr.mxu0 0.0
      %1758 = vmatpush1.msra.mxu0 %v1747
      %1759 = vmatprep.subr.mxu0 0.0
      %1760 = vmatpush1.msra.mxu0 %v1748
      %1761 = vmatprep.subr.mxu0 0.0
      %1762 = vmatpush1.msra.mxu0 0.0
      %1763 = vmatprep.subr.mxu0 0.0
      %1764 = vmatpush1.msra.mxu0 0.0
      %1765 = vmatprep.subr.mxu0 0.0
      %1766 = vmatpush1.msra.mxu0 0.0
      %1767 = vmatprep.subr.mxu0 0.0
      %1768 = vmatpush1.msra.mxu0 0.0
      %1769 = vmatprep.subr.mxu0 0.0
      %1770 = vmatpush1.msra.mxu0 0.0
      %1771 = vmatprep.subr.mxu0 0.0
      %1772 = vmatpush1.msra.mxu0 0.0
      %1773 = vmatprep.subr.mxu0 0.0
      %1774 = vmatpush1.msra.mxu0 0.0
      %1775 = vmatprep.subr.mxu0 0.0
      %1776 = vmatpush1.msra.mxu0 0.0
      %1777 = vmatprep.subr.mxu0 0.0
      %1778 = vmatpush1.msra.mxu0 0.0
      %1779 = vmatprep.subr.mxu0 0.0
      %1780 = vmatpush1.msra.mxu0 0.0
      %1781 = vmatprep.subr.mxu0 0.0
      %1782 = vmatpush1.msra.mxu0 0.0
      %1783 = vmatprep.subr.mxu0 0.0
      %1784 = vmatpush1.msra.mxu0 0.0
      %1785 = vmatprep.subr.mxu0 0.0
      %1786 = vmatpush1.msra.mxu0 0.0
      %1787 = vmatprep.subr.mxu0 0.0
      %1788 = vmatpush1.msra.mxu0 0.0
      %1789 = vmatprep.subr.mxu0 0.0
      %1790 = vmatpush1.msra.mxu0 0.0
      %1791 = vmatprep.subr.mxu0 0.0
      %1792 = vmatpush1.msra.mxu0 0.0
      %1793 = vmatprep.subr.mxu0 0.0
      %1794 = vmatpush1.msra.mxu0 0.0
      %1795 = vmatprep.subr.mxu0 0.0
      %1796 = vmatpush1.msra.mxu0 0.0
      %1797 = vmatprep.subr.mxu0 0.0
      %1798 = vmatpush1.msra.mxu0 0.0
      %1799 = vmatprep.subr.mxu0 0.0
      %1800 = vmatpush1.msra.mxu0 0.0
      %1801 = vmatprep.subr.mxu0 0.0
      %1802 = vmatpush1.msra.mxu0 0.0
      %1803 = vmatprep.subr.mxu0 0.0
      %1804 = vmatpush1.msra.mxu0 0.0
      %1805 = vmatprep.subr.mxu0 0.0
      %1806 = vmatpush1.msra.mxu0 0.0
      %1807 = vmatprep.subr.mxu0 0.0
      %1808 = vmatpush1.msra.mxu0 0.0
      %1809 = vmatprep.subr.mxu0 0.0
      %1810 = vmatpush1.msra.mxu0 0.0
      %1811 = vmatprep.subr.mxu0 0.0
      %1812 = vmatpush1.msra.mxu0 0.0
      %1813 = vmatprep.subr.mxu0 0.0
      %1814 = vmatpush1.msra.mxu0 0.0
      %1815 = vmatprep.subr.mxu0 0.0
      %1816 = vmatpush1.msra.mxu0 0.0
      %1817 = vmatprep.mubr.f32.mxu0 0.0
      %1818 = vmatmul.mubr.f32.gmra.mrb[0].mxu0 %v1751
      %v1819 = vpop.f32.mrb[0].mxu0
      %v1820 = vadd.f32 %v1749, %v1819
      %v1821 = vpop.f32.mrb[0].mxu0
      %1822 = vdwg.mxu0
      %v1823 = vxor.u32 %v1820, 2147483648
      %v1824 = vmul.f32 %v1823, 1.442695
      %v1825 = vpow.pop %v1824
      %v1826 = vadd.f32 %v1825, 1.0
      %v1827 = vrcp.pop %v1826
      %v1828 = vmul.f32 1.0, %v1827
      %s1830 = vtos %v1828
      %v1831 = vstv %s1830
      %1833 = vst [vmem:[%s545] sm:$0xff] %v1831
      %p1834 = scmp.lt.s32.totalorder %s30, 1
      %s1835 = scalar_select %p1834, %s30, 1
      %s1836 = smul.addr %s1835, 8
      %s1837 = scalar_lea.vmem %s17, %s1836
      // Predicated region
      $region89: #{classification_transformer.1} parent=87 // pred_check
        %p1838 = pneg %p410
      $region90: #{classification_transformer.1} parent=87 // pred_check_branch
        %1840 = sbr.rel (%p1838) target = $region92
      $region91: #{classification_transformer.1} parent=87 // pred_region
        _
      $region92: #{classification_transformer.1} parent=87 // pred_fallthru
        _
    $region88: #{classification_transformer.1} parent=5 // pred_fallthru
      _
    %p1841 = scmp.le.s32.totalorder 2, %s25
    // Predicated region
    $region93: #{classification_transformer.1} parent=5 // pred_check
      %p1842 = pneg %p1841
    $region94: #{classification_transformer.1} parent=5 // pred_check_branch
      %1844 = sbr.rel (%p1842) target = $region96
    $region95: #{classification_transformer.1} parent=5 // pred_region
      %s1845 = ssub.s32 %s25, 2
      // Predicated region
      $region97: #{classification_transformer.1} parent=95 // pred_check
        %p1846 = pneg %p416
      $region98: #{classification_transformer.1} parent=95 // pred_check_branch
        %1848 = sbr.rel (%p1846) target = $region100
      $region99: #{classification_transformer.1} parent=95 // pred_region
        %p1849 = scmp.lt.s32.totalorder %s31, 1
        %s1850 = scalar_select %p1849, %s31, 1
        %s1851 = smul.addr %s1850, 8
        %s1852 = scalar_lea.vmem %s17, %s1851
      $region100: #{classification_transformer.1} parent=95 // pred_fallthru
        _
    $region96: #{classification_transformer.1} parent=5 // pred_fallthru
      _
  $region6: #{classification_transformer.1} parent=0 // loop_footer
    %s29 = sadd.s32 1, %s25
  $region7: #{classification_transformer.1} parent=0 // loop_footer_branch
    %24 = sbr.rel target = $region3
  $region8: #{classification_transformer.1} parent=0 // loop_exit
    _

</llo_original>
